<compile_context>
chip_gen: v6e
topology: v6e:2x2x1
jax: 0.10.0
libtpu: 0.0.40
codegen_flags: <defaults>
</compile_context>

<pallas_src>
import functools

import jax
import jax.numpy as jnp
from jax import lax
from jax.experimental import pallas as pl
from jax.experimental.pallas import tpu as pltpu


# ----------------------------------------------------------------------------
# Fused Pallas kernel (single gridless pallas_call, everything VMEM-resident)
# ----------------------------------------------------------------------------
def _fused_lstm_model_kernel(
    x_ref,        # (T*Bp, 2*F)   row block t = [x[t] | x[T-1-t]]  (time-major)
    wih1_ref,     # (2*F, 8*H1)   layer-1 input weights, gate-major fwd/bwd packed
    whh1_ref,     # (2*H1, 8*H1)  layer-1 block-diag recurrent weights, gate-major
    b1_ref,       # (1, 8*H1)     layer-1 combined bias (b_ih + b_hh), gate-major
    ln1g_ref,     # (1, 2*H1)
    ln1b_ref,     # (1, 2*H1)
    w2ih_ref,     # (2*H1, 4*H2)
    w2hh_ref,     # (H2, 4*H2)
    b2_ref,       # (1, 4*H2)
    ln2g_ref,     # (1, H2)
    ln2b_ref,     # (1, H2)
    d1w_ref,      # (H2, D)
    d1b_ref,      # (1, D)
    d2w_ref,      # (1, D)        final weight as a row (originally (D, 1))
    d2b_ref,      # (1, 1)
    out_ref,      # (Bp, 1)
    *, T, B, H1, H2, mxu_dtype,
):
    f32 = jnp.float32

    def mm(a, w):
        # w is pre-cast to mxu_dtype outside the serial loops.
        return jnp.dot(a.astype(mxu_dtype), w, preferred_element_type=f32)

    # ---------------- biLSTM layer 1 (both directions fused) ----------------
    wih1 = wih1_ref[...].astype(mxu_dtype)
    whh1 = whh1_ref[...].astype(mxu_dtype)
    # Hoisted input projection for ALL timesteps and BOTH directions at once.
    proj1 = mm(x_ref[...], wih1) + b1_ref[...]                    # (T*B, 8*H1)

    W = 2 * H1                     # fused state width [fwd | bwd]
    h1 = jnp.zeros((B, W), f32)
    c1 = jnp.zeros((B, W), f32)
    hs = []
    for t in range(T):             # fully unrolled (T static, small)
        # gates, gate-major layout: [i | f | g | o], each 2*H1 wide ([fwd|bwd])
        g = proj1[t * B:(t + 1) * B, :] + mm(h1, whh1)            # (B, 8*H1)
        sig = jax.nn.sigmoid(g)
        tnh = jnp.tanh(g)
        i_g = sig[:, 0 * W:1 * W]
        f_g = sig[:, 1 * W:2 * W]
        g_g = tnh[:, 2 * W:3 * W]
        o_g = sig[:, 3 * W:4 * W]
        c1 = f_g * c1 + i_g * g_g
        h1 = o_g * jnp.tanh(c1)
        hs.append(h1)              # register-carried, no VMEM scratch stores

    # Assemble biLSTM output AFTER the serial loop:
    #   row block t = [h_fwd(step t) | h_bwd(step T-1-t)]
    fwd_stack = jnp.concatenate([hs[t][:, :H1] for t in range(T)], axis=0)
    bwd_stack = jnp.concatenate([hs[T - 1 - t][:, H1:] for t in range(T)], axis=0)
    o1 = jnp.concatenate([fwd_stack, bwd_stack], axis=-1)         # (T*B, 2*H1)

    # ---------------- LayerNorm 1 (dropout1 = identity in eval) -------------
    mean1 = jnp.mean(o1, axis=-1, keepdims=True)
    var1 = jnp.mean((o1 - mean1) ** 2, axis=-1, keepdims=True)
    o1 = (o1 - mean1) * lax.rsqrt(var1 + 1e-5) * ln1g_ref[...] + ln1b_ref[...]

    # ---------------- LSTM layer 2 (only last hidden state kept) ------------
    w2ih = w2ih_ref[...].astype(mxu_dtype)
    w2hh = w2hh_ref[...].astype(mxu_dtype)
    proj2 = mm(o1, w2ih) + b2_ref[...]                            # (T*B, 4*H2)
    h2 = jnp.zeros((B, H2), f32)
    c2 = jnp.zeros((B, H2), f32)
    for t in range(T):
        g2 = proj2[t * B:(t + 1) * B, :] + mm(h2, w2hh)           # (B, 4*H2)
        sig = jax.nn.sigmoid(g2)
        tnh = jnp.tanh(g2)
        c2 = sig[:, H2:2 * H2] * c2 + sig[:, 0:H2] * tnh[:, 2 * H2:3 * H2]
        h2 = sig[:, 3 * H2:4 * H2] * jnp.tanh(c2)

    # ---------------- LayerNorm 2 + dense head (dropout2 = identity) --------
    mean2 = jnp.mean(h2, axis=-1, keepdims=True)
    var2 = jnp.mean((h2 - mean2) ** 2, axis=-1, keepdims=True)
    y = (h2 - mean2) * lax.rsqrt(var2 + 1e-5) * ln2g_ref[...] + ln2b_ref[...]
    d1 = jnp.maximum(mm(y, d1w_ref[...].astype(mxu_dtype)) + d1b_ref[...], 0.0)
    # 1-wide output: VPU lane reduction instead of a wasted MXU pass.
    out_ref[...] = (
        jnp.sum(d1 * d2w_ref[...], axis=-1, keepdims=True) + d2b_ref[...]
    )


# ----------------------------------------------------------------------------
# One-time parameter packing (outside jit — not on the per-call path)
# ----------------------------------------------------------------------------
def prepare_params(p):
    """Pack PyTorch-layout params into the fused-kernel layouts (runs once)."""
    F = p["l1f_wih"].shape[0]
    H1 = p["l1f_whh"].shape[0]
    H2 = p["l2_whh"].shape[0]
    D = p["d1_w"].shape[1]
    z_ih = jnp.zeros((F, 4 * H1), jnp.float32)
    z_hh = jnp.zeros((H1, 4 * H1), jnp.float32)

    def gate_major(mat_f, mat_b):
        # (rows, 4*H1) fwd & bwd -> (rows, 8*H1) packed [i_f i_b|f_f f_b|g_f g_b|o_f o_b]
        cols = []
        for g in range(4):
            cols.append(mat_f[:, g * H1:(g + 1) * H1])
            cols.append(mat_b[:, g * H1:(g + 1) * H1])
        return jnp.concatenate(cols, axis=1)

    # Input weights: rows 0:F act on x[t] (fwd), rows F:2F act on x[T-1-t] (bwd).
    wih1 = jnp.concatenate(
        [gate_major(p["l1f_wih"], z_ih), gate_major(z_ih, p["l1b_wih"])], axis=0)
    # Block-diagonal recurrent weights: rows 0:H1 = h_fwd, rows H1:2H1 = h_bwd.
    whh1 = jnp.concatenate(
        [gate_major(p["l1f_whh"], z_hh), gate_major(z_hh, p["l1b_whh"])], axis=0)
    b1 = gate_major(p["l1f_b"], p["l1b_b"])

    return {
        "wih1": wih1,                                   # (2F, 8*H1)
        "whh1": whh1,                                   # (2*H1, 8*H1)
        "b1": b1,                                       # (1, 8*H1)
        "ln1_g": p["ln1_g"].reshape(1, 2 * H1),
        "ln1_b": p["ln1_b"].reshape(1, 2 * H1),
        "l2_wih": p["l2_wih"],                          # (2*H1, 4*H2)
        "l2_whh": p["l2_whh"],                          # (H2, 4*H2)
        "l2_b": p["l2_b"],                              # (1, 4*H2)
        "ln2_g": p["ln2_g"].reshape(1, H2),
        "ln2_b": p["ln2_b"].reshape(1, H2),
        "d1_w": p["d1_w"],                              # (H2, D)
        "d1_b": p["d1_b"].reshape(1, D),
        "d2_w": p["d2_w"].reshape(1, D),                # (D,1) -> row
        "d2_b": p["d2_b"].reshape(1, 1),
    }


# ----------------------------------------------------------------------------
# Wrapper: single fused pallas_call
# ----------------------------------------------------------------------------
@functools.partial(jax.jit, static_argnames=("use_bf16_matmul",))
def lstm_model_forward(x_btf, prep, use_bf16_matmul=False):
    """Full forward pass. x_btf: (B, T, F) batch_first, returns (B, 1)."""
    B, T, F = x_btf.shape
    H1 = prep["whh1"].shape[0] // 2
    H2 = prep["l2_whh"].shape[0]

    # Pad batch to a full 8-sublane multiple so every per-step tile is aligned.
    Bp = max(8, ((B + 7) // 8) * 8)
    if Bp != B:
        x_btf = jnp.pad(x_btf, ((0, Bp - B), (0, 0), (0, 0)))
    # Time-major, with fwd/bwd inputs lane-paired: row block t = [x[t] | x[T-1-t]].
    x_tm = jnp.transpose(x_btf, (1, 0, 2))                      # (T, Bp, F)
    x2d = jnp.concatenate([x_tm, x_tm[::-1]], axis=-1).reshape(T * Bp, 2 * F)

    kernel = functools.partial(
        _fused_lstm_model_kernel, T=T, B=Bp, H1=H1, H2=H2,
        mxu_dtype=jnp.bfloat16 if use_bf16_matmul else jnp.float32)

    out = pl.pallas_call(
        kernel,
        out_shape=jax.ShapeDtypeStruct((Bp, 1), jnp.float32),
    )(
        x2d,
        prep["wih1"], prep["whh1"], prep["b1"],
        prep["ln1_g"], prep["ln1_b"],
        prep["l2_wih"], prep["l2_whh"], prep["l2_b"],
        prep["ln2_g"], prep["ln2_b"],
        prep["d1_w"], prep["d1_b"], prep["d2_w"], prep["d2_b"],
    )
    return out[:B]


# ----------------------------------------------------------------------------
# Pure-JAX reference (for sanity checking the fused kernel)
# ----------------------------------------------------------------------------
def _lstm_ref(x_tbf, w_ih_t, w_hh_t, bias):
    H = w_hh_t.shape[0]

    def step(carry, x_t):
        h, c = carry
        g = x_t @ w_ih_t + h @ w_hh_t + bias[0]
        i = jax.nn.sigmoid(g[:, :H])
        f = jax.nn.sigmoid(g[:, H:2 * H])
        gg = jnp.tanh(g[:, 2 * H:3 * H])
        o = jax.nn.sigmoid(g[:, 3 * H:])
        c = f * c + i * gg
        h = o * jnp.tanh(c)
        return (h, c), h

    Bb = x_tbf.shape[1]
    init = (jnp.zeros((Bb, H)), jnp.zeros((Bb, H)))
    _, hs = lax.scan(step, init, x_tbf)
    return hs


def _ln_ref(x, g, b):
    m = x.mean(-1, keepdims=True)
    v = ((x - m) ** 2).mean(-1, keepdims=True)
    return (x - m) / jnp.sqrt(v + 1e-5) * g + b


def forward_ref(x_btf, p):
    x = jnp.transpose(x_btf, (1, 0, 2))
    hf = _lstm_ref(x, p["l1f_wih"], p["l1f_whh"], p["l1f_b"])
    hb = _lstm_ref(x[::-1], p["l1b_wih"], p["l1b_whh"], p["l1b_b"])[::-1]
    o1 = _ln_ref(jnp.concatenate([hf, hb], -1), p["ln1_g"], p["ln1_b"])
    h2 = _lstm_ref(o1, p["l2_wih"], p["l2_whh"], p["l2_b"])[-1]
    y = _ln_ref(h2, p["ln2_g"], p["ln2_b"])
    d1 = jnp.maximum(y @ p["d1_w"] + p["d1_b"], 0.0)
    return d1 @ p["d2_w"] + p["d2_b"]


# ----------------------------------------------------------------------------
# Main
# ----------------------------------------------------------------------------
if __name__ == "__main__":
    # Small config consistent with the module (config.yaml-style values):
    B, T, F = 2, 8, 8          # batch, past_steps, n_features
    H1, H2, D = 32, 32, 32     # lstm_units_1, lstm_units_2, dense_units

    key = jax.random.PRNGKey(0)
    keys = jax.random.split(key, 20)

    def u(k, shape, scale=0.1):
        return jax.random.uniform(k, shape, jnp.float32, -scale, scale)

    params = {
        # biLSTM layer 1 (forward direction), weights stored transposed: (in, 4H)
        "l1f_wih": u(keys[0], (F, 4 * H1)),
        "l1f_whh": u(keys[1], (H1, 4 * H1)),
        "l1f_b":   u(keys[2], (1, 4 * H1)),      # bias_ih + bias_hh combined
        # biLSTM layer 1 (reverse direction)
        "l1b_wih": u(keys[3], (F, 4 * H1)),
        "l1b_whh": u(keys[4], (H1, 4 * H1)),
        "l1b_b":   u(keys[5], (1, 4 * H1)),
        # LayerNorm 1 over 2*H1
        "ln1_g": jnp.ones((2 * H1,), jnp.float32),
        "ln1_b": jnp.zeros((2 * H1,), jnp.float32),
        # LSTM layer 2: input 2*H1 -> H2
        "l2_wih": u(keys[6], (2 * H1, 4 * H2)),
        "l2_whh": u(keys[7], (H2, 4 * H2)),
        "l2_b":   u(keys[8], (1, 4 * H2)),
        # LayerNorm 2 over H2
        "ln2_g": jnp.ones((H2,), jnp.float32),
        "ln2_b": jnp.zeros((H2,), jnp.float32),
        # Dense head
        "d1_w": u(keys[9], (H2, D)),
        "d1_b": u(keys[10], (D,)),
        "d2_w": u(keys[11], (D, 1)),
        "d2_b": u(keys[12], (1,)),
    }

    x = jax.random.normal(keys[13], (B, T, F), jnp.float32)

    # One-time weight packing (outside the jitted per-call path).
    prep = jax.tree_util.tree_map(jax.block_until_ready, prepare_params(params))

    out = jax.block_until_ready(lstm_model_forward(x, prep))
    assert out.shape == (B, 1), out.shape

    ref = jax.block_until_ready(forward_ref(x, params))
    assert jnp.allclose(out, ref, atol=2e-3, rtol=2e-3), (out, ref)

    print("KERNEL_OK")
</pallas_src>

<mosaic_0001>
module attributes {stable_mosaic.version = 11 : i64} {
  func.func @_fused_lstm_model_kernel(%arg0: memref<64x16xf32, #tpu.memory_space<vmem>>, %arg1: memref<16x256xf32, #tpu.memory_space<vmem>>, %arg2: memref<64x256xf32, #tpu.memory_space<vmem>>, %arg3: memref<1x256xf32, #tpu.memory_space<vmem>>, %arg4: memref<1x64xf32, #tpu.memory_space<vmem>>, %arg5: memref<1x64xf32, #tpu.memory_space<vmem>>, %arg6: memref<64x128xf32, #tpu.memory_space<vmem>>, %arg7: memref<32x128xf32, #tpu.memory_space<vmem>>, %arg8: memref<1x128xf32, #tpu.memory_space<vmem>>, %arg9: memref<1x32xf32, #tpu.memory_space<vmem>>, %arg10: memref<1x32xf32, #tpu.memory_space<vmem>>, %arg11: memref<32x32xf32, #tpu.memory_space<vmem>>, %arg12: memref<1x32xf32, #tpu.memory_space<vmem>>, %arg13: memref<1x32xf32, #tpu.memory_space<vmem>>, %arg14: memref<1x1xf32, #tpu.memory_space<vmem>>, %arg15: memref<8x1xf32, #tpu.memory_space<vmem>>) attributes {dimension_semantics = [], scalar_prefetch = 0 : i64, scratch_operands = 0 : i64, tpu.core_type = #tpu.core_type<tc>} {
    %c0 = arith.constant 0 : index
    %c0_0 = arith.constant 0 : index
    %0 = vector.load %arg1[%c0, %c0_0] : memref<16x256xf32, #tpu.memory_space<vmem>>, vector<16x256xf32>
    %c0_1 = arith.constant 0 : index
    %c0_2 = arith.constant 0 : index
    %1 = vector.load %arg2[%c0_1, %c0_2] : memref<64x256xf32, #tpu.memory_space<vmem>>, vector<64x256xf32>
    %c0_3 = arith.constant 0 : index
    %c0_4 = arith.constant 0 : index
    %2 = vector.load %arg0[%c0_3, %c0_4] : memref<64x16xf32, #tpu.memory_space<vmem>>, vector<64x16xf32>
    %cst = arith.constant dense<0.000000e+00> : vector<64x256xf32>
    %3 = tpu.matmul %2, %0, %cst {dimension_numbers = #tpu.dot_dimension_numbers<[1], [0], [0], [1], [0, 0, 1, 1], [], []>} : vector<64x16xf32>, vector<16x256xf32>, vector<64x256xf32> -> vector<64x256xf32>
    %c0_5 = arith.constant 0 : index
    %c0_6 = arith.constant 0 : index
    %4 = vector.load %arg3[%c0_5, %c0_6] : memref<1x256xf32, #tpu.memory_space<vmem>>, vector<1x256xf32>
    %5 = vector.broadcast %4 : vector<1x256xf32> to vector<64x256xf32>
    %6 = arith.addf %3, %5 : vector<64x256xf32>
    %cst_7 = arith.constant 0.000000e+00 : f32
    %7 = vector.broadcast %cst_7 : f32 to vector<8x64xf32>
    %cst_8 = arith.constant 0.000000e+00 : f32
    %8 = vector.broadcast %cst_8 : f32 to vector<8x64xf32>
    %9 = vector.extract_strided_slice %6 {offsets = [0, 0], sizes = [8, 256], strides = [1, 1]} : vector<64x256xf32> to vector<8x256xf32>
    %cst_9 = arith.constant dense<0.000000e+00> : vector<8x256xf32>
    %10 = tpu.matmul %7, %1, %cst_9 {dimension_numbers = #tpu.dot_dimension_numbers<[1], [0], [0], [1], [0, 0, 1, 1], [], []>} : vector<8x64xf32>, vector<64x256xf32>, vector<8x256xf32> -> vector<8x256xf32>
    %11 = arith.addf %9, %10 : vector<8x256xf32>
    %12 = arith.negf %11 : vector<8x256xf32>
    %13 = math.exp %12 : vector<8x256xf32>
    %cst_10 = arith.constant 1.000000e+00 : f32
    %14 = vector.broadcast %cst_10 : f32 to vector<8x256xf32>
    %15 = arith.addf %14, %13 : vector<8x256xf32>
    %16 = arith.divf %14, %15 : vector<8x256xf32>
    %17 = math.tanh %11 : vector<8x256xf32>
    %18 = vector.extract_strided_slice %16 {offsets = [0, 0], sizes = [8, 64], strides = [1, 1]} : vector<8x256xf32> to vector<8x64xf32>
    %19 = vector.extract_strided_slice %16 {offsets = [0, 64], sizes = [8, 64], strides = [1, 1]} : vector<8x256xf32> to vector<8x64xf32>
    %20 = vector.extract_strided_slice %17 {offsets = [0, 128], sizes = [8, 64], strides = [1, 1]} : vector<8x256xf32> to vector<8x64xf32>
    %21 = vector.extract_strided_slice %16 {offsets = [0, 192], sizes = [8, 64], strides = [1, 1]} : vector<8x256xf32> to vector<8x64xf32>
    %22 = arith.mulf %19, %8 : vector<8x64xf32>
    %23 = arith.mulf %18, %20 : vector<8x64xf32>
    %24 = arith.addf %22, %23 : vector<8x64xf32>
    %25 = math.tanh %24 : vector<8x64xf32>
    %26 = arith.mulf %21, %25 : vector<8x64xf32>
    %27 = vector.extract_strided_slice %6 {offsets = [8, 0], sizes = [8, 256], strides = [1, 1]} : vector<64x256xf32> to vector<8x256xf32>
    %cst_11 = arith.constant dense<0.000000e+00> : vector<8x256xf32>
    %28 = tpu.matmul %26, %1, %cst_11 {dimension_numbers = #tpu.dot_dimension_numbers<[1], [0], [0], [1], [0, 0, 1, 1], [], []>} : vector<8x64xf32>, vector<64x256xf32>, vector<8x256xf32> -> vector<8x256xf32>
    %29 = arith.addf %27, %28 : vector<8x256xf32>
    %30 = arith.negf %29 : vector<8x256xf32>
    %31 = math.exp %30 : vector<8x256xf32>
    %cst_12 = arith.constant 1.000000e+00 : f32
    %32 = vector.broadcast %cst_12 : f32 to vector<8x256xf32>
    %33 = arith.addf %32, %31 : vector<8x256xf32>
    %34 = arith.divf %32, %33 : vector<8x256xf32>
    %35 = math.tanh %29 : vector<8x256xf32>
    %36 = vector.extract_strided_slice %34 {offsets = [0, 0], sizes = [8, 64], strides = [1, 1]} : vector<8x256xf32> to vector<8x64xf32>
    %37 = vector.extract_strided_slice %34 {offsets = [0, 64], sizes = [8, 64], strides = [1, 1]} : vector<8x256xf32> to vector<8x64xf32>
    %38 = vector.extract_strided_slice %35 {offsets = [0, 128], sizes = [8, 64], strides = [1, 1]} : vector<8x256xf32> to vector<8x64xf32>
    %39 = vector.extract_strided_slice %34 {offsets = [0, 192], sizes = [8, 64], strides = [1, 1]} : vector<8x256xf32> to vector<8x64xf32>
    %40 = arith.mulf %37, %24 : vector<8x64xf32>
    %41 = arith.mulf %36, %38 : vector<8x64xf32>
    %42 = arith.addf %40, %41 : vector<8x64xf32>
    %43 = math.tanh %42 : vector<8x64xf32>
    %44 = arith.mulf %39, %43 : vector<8x64xf32>
    %45 = vector.extract_strided_slice %6 {offsets = [16, 0], sizes = [8, 256], strides = [1, 1]} : vector<64x256xf32> to vector<8x256xf32>
    %cst_13 = arith.constant dense<0.000000e+00> : vector<8x256xf32>
    %46 = tpu.matmul %44, %1, %cst_13 {dimension_numbers = #tpu.dot_dimension_numbers<[1], [0], [0], [1], [0, 0, 1, 1], [], []>} : vector<8x64xf32>, vector<64x256xf32>, vector<8x256xf32> -> vector<8x256xf32>
    %47 = arith.addf %45, %46 : vector<8x256xf32>
    %48 = arith.negf %47 : vector<8x256xf32>
    %49 = math.exp %48 : vector<8x256xf32>
    %cst_14 = arith.constant 1.000000e+00 : f32
    %50 = vector.broadcast %cst_14 : f32 to vector<8x256xf32>
    %51 = arith.addf %50, %49 : vector<8x256xf32>
    %52 = arith.divf %50, %51 : vector<8x256xf32>
    %53 = math.tanh %47 : vector<8x256xf32>
    %54 = vector.extract_strided_slice %52 {offsets = [0, 0], sizes = [8, 64], strides = [1, 1]} : vector<8x256xf32> to vector<8x64xf32>
    %55 = vector.extract_strided_slice %52 {offsets = [0, 64], sizes = [8, 64], strides = [1, 1]} : vector<8x256xf32> to vector<8x64xf32>
    %56 = vector.extract_strided_slice %53 {offsets = [0, 128], sizes = [8, 64], strides = [1, 1]} : vector<8x256xf32> to vector<8x64xf32>
    %57 = vector.extract_strided_slice %52 {offsets = [0, 192], sizes = [8, 64], strides = [1, 1]} : vector<8x256xf32> to vector<8x64xf32>
    %58 = arith.mulf %55, %42 : vector<8x64xf32>
    %59 = arith.mulf %54, %56 : vector<8x64xf32>
    %60 = arith.addf %58, %59 : vector<8x64xf32>
    %61 = math.tanh %60 : vector<8x64xf32>
    %62 = arith.mulf %57, %61 : vector<8x64xf32>
    %63 = vector.extract_strided_slice %6 {offsets = [24, 0], sizes = [8, 256], strides = [1, 1]} : vector<64x256xf32> to vector<8x256xf32>
    %cst_15 = arith.constant dense<0.000000e+00> : vector<8x256xf32>
    %64 = tpu.matmul %62, %1, %cst_15 {dimension_numbers = #tpu.dot_dimension_numbers<[1], [0], [0], [1], [0, 0, 1, 1], [], []>} : vector<8x64xf32>, vector<64x256xf32>, vector<8x256xf32> -> vector<8x256xf32>
    %65 = arith.addf %63, %64 : vector<8x256xf32>
    %66 = arith.negf %65 : vector<8x256xf32>
    %67 = math.exp %66 : vector<8x256xf32>
    %cst_16 = arith.constant 1.000000e+00 : f32
    %68 = vector.broadcast %cst_16 : f32 to vector<8x256xf32>
    %69 = arith.addf %68, %67 : vector<8x256xf32>
    %70 = arith.divf %68, %69 : vector<8x256xf32>
    %71 = math.tanh %65 : vector<8x256xf32>
    %72 = vector.extract_strided_slice %70 {offsets = [0, 0], sizes = [8, 64], strides = [1, 1]} : vector<8x256xf32> to vector<8x64xf32>
    %73 = vector.extract_strided_slice %70 {offsets = [0, 64], sizes = [8, 64], strides = [1, 1]} : vector<8x256xf32> to vector<8x64xf32>
    %74 = vector.extract_strided_slice %71 {offsets = [0, 128], sizes = [8, 64], strides = [1, 1]} : vector<8x256xf32> to vector<8x64xf32>
    %75 = vector.extract_strided_slice %70 {offsets = [0, 192], sizes = [8, 64], strides = [1, 1]} : vector<8x256xf32> to vector<8x64xf32>
    %76 = arith.mulf %73, %60 : vector<8x64xf32>
    %77 = arith.mulf %72, %74 : vector<8x64xf32>
    %78 = arith.addf %76, %77 : vector<8x64xf32>
    %79 = math.tanh %78 : vector<8x64xf32>
    %80 = arith.mulf %75, %79 : vector<8x64xf32>
    %81 = vector.extract_strided_slice %6 {offsets = [32, 0], sizes = [8, 256], strides = [1, 1]} : vector<64x256xf32> to vector<8x256xf32>
    %cst_17 = arith.constant dense<0.000000e+00> : vector<8x256xf32>
    %82 = tpu.matmul %80, %1, %cst_17 {dimension_numbers = #tpu.dot_dimension_numbers<[1], [0], [0], [1], [0, 0, 1, 1], [], []>} : vector<8x64xf32>, vector<64x256xf32>, vector<8x256xf32> -> vector<8x256xf32>
    %83 = arith.addf %81, %82 : vector<8x256xf32>
    %84 = arith.negf %83 : vector<8x256xf32>
    %85 = math.exp %84 : vector<8x256xf32>
    %cst_18 = arith.constant 1.000000e+00 : f32
    %86 = vector.broadcast %cst_18 : f32 to vector<8x256xf32>
    %87 = arith.addf %86, %85 : vector<8x256xf32>
    %88 = arith.divf %86, %87 : vector<8x256xf32>
    %89 = math.tanh %83 : vector<8x256xf32>
    %90 = vector.extract_strided_slice %88 {offsets = [0, 0], sizes = [8, 64], strides = [1, 1]} : vector<8x256xf32> to vector<8x64xf32>
    %91 = vector.extract_strided_slice %88 {offsets = [0, 64], sizes = [8, 64], strides = [1, 1]} : vector<8x256xf32> to vector<8x64xf32>
    %92 = vector.extract_strided_slice %89 {offsets = [0, 128], sizes = [8, 64], strides = [1, 1]} : vector<8x256xf32> to vector<8x64xf32>
    %93 = vector.extract_strided_slice %88 {offsets = [0, 192], sizes = [8, 64], strides = [1, 1]} : vector<8x256xf32> to vector<8x64xf32>
    %94 = arith.mulf %91, %78 : vector<8x64xf32>
    %95 = arith.mulf %90, %92 : vector<8x64xf32>
    %96 = arith.addf %94, %95 : vector<8x64xf32>
    %97 = math.tanh %96 : vector<8x64xf32>
    %98 = arith.mulf %93, %97 : vector<8x64xf32>
    %99 = vector.extract_strided_slice %6 {offsets = [40, 0], sizes = [8, 256], strides = [1, 1]} : vector<64x256xf32> to vector<8x256xf32>
    %cst_19 = arith.constant dense<0.000000e+00> : vector<8x256xf32>
    %100 = tpu.matmul %98, %1, %cst_19 {dimension_numbers = #tpu.dot_dimension_numbers<[1], [0], [0], [1], [0, 0, 1, 1], [], []>} : vector<8x64xf32>, vector<64x256xf32>, vector<8x256xf32> -> vector<8x256xf32>
    %101 = arith.addf %99, %100 : vector<8x256xf32>
    %102 = arith.negf %101 : vector<8x256xf32>
    %103 = math.exp %102 : vector<8x256xf32>
    %cst_20 = arith.constant 1.000000e+00 : f32
    %104 = vector.broadcast %cst_20 : f32 to vector<8x256xf32>
    %105 = arith.addf %104, %103 : vector<8x256xf32>
    %106 = arith.divf %104, %105 : vector<8x256xf32>
    %107 = math.tanh %101 : vector<8x256xf32>
    %108 = vector.extract_strided_slice %106 {offsets = [0, 0], sizes = [8, 64], strides = [1, 1]} : vector<8x256xf32> to vector<8x64xf32>
    %109 = vector.extract_strided_slice %106 {offsets = [0, 64], sizes = [8, 64], strides = [1, 1]} : vector<8x256xf32> to vector<8x64xf32>
    %110 = vector.extract_strided_slice %107 {offsets = [0, 128], sizes = [8, 64], strides = [1, 1]} : vector<8x256xf32> to vector<8x64xf32>
    %111 = vector.extract_strided_slice %106 {offsets = [0, 192], sizes = [8, 64], strides = [1, 1]} : vector<8x256xf32> to vector<8x64xf32>
    %112 = arith.mulf %109, %96 : vector<8x64xf32>
    %113 = arith.mulf %108, %110 : vector<8x64xf32>
    %114 = arith.addf %112, %113 : vector<8x64xf32>
    %115 = math.tanh %114 : vector<8x64xf32>
    %116 = arith.mulf %111, %115 : vector<8x64xf32>
    %117 = vector.extract_strided_slice %6 {offsets = [48, 0], sizes = [8, 256], strides = [1, 1]} : vector<64x256xf32> to vector<8x256xf32>
    %cst_21 = arith.constant dense<0.000000e+00> : vector<8x256xf32>
    %118 = tpu.matmul %116, %1, %cst_21 {dimension_numbers = #tpu.dot_dimension_numbers<[1], [0], [0], [1], [0, 0, 1, 1], [], []>} : vector<8x64xf32>, vector<64x256xf32>, vector<8x256xf32> -> vector<8x256xf32>
    %119 = arith.addf %117, %118 : vector<8x256xf32>
    %120 = arith.negf %119 : vector<8x256xf32>
    %121 = math.exp %120 : vector<8x256xf32>
    %cst_22 = arith.constant 1.000000e+00 : f32
    %122 = vector.broadcast %cst_22 : f32 to vector<8x256xf32>
    %123 = arith.addf %122, %121 : vector<8x256xf32>
    %124 = arith.divf %122, %123 : vector<8x256xf32>
    %125 = math.tanh %119 : vector<8x256xf32>
    %126 = vector.extract_strided_slice %124 {offsets = [0, 0], sizes = [8, 64], strides = [1, 1]} : vector<8x256xf32> to vector<8x64xf32>
    %127 = vector.extract_strided_slice %124 {offsets = [0, 64], sizes = [8, 64], strides = [1, 1]} : vector<8x256xf32> to vector<8x64xf32>
    %128 = vector.extract_strided_slice %125 {offsets = [0, 128], sizes = [8, 64], strides = [1, 1]} : vector<8x256xf32> to vector<8x64xf32>
    %129 = vector.extract_strided_slice %124 {offsets = [0, 192], sizes = [8, 64], strides = [1, 1]} : vector<8x256xf32> to vector<8x64xf32>
    %130 = arith.mulf %127, %114 : vector<8x64xf32>
    %131 = arith.mulf %126, %128 : vector<8x64xf32>
    %132 = arith.addf %130, %131 : vector<8x64xf32>
    %133 = math.tanh %132 : vector<8x64xf32>
    %134 = arith.mulf %129, %133 : vector<8x64xf32>
    %135 = vector.extract_strided_slice %6 {offsets = [56, 0], sizes = [8, 256], strides = [1, 1]} : vector<64x256xf32> to vector<8x256xf32>
    %cst_23 = arith.constant dense<0.000000e+00> : vector<8x256xf32>
    %136 = tpu.matmul %134, %1, %cst_23 {dimension_numbers = #tpu.dot_dimension_numbers<[1], [0], [0], [1], [0, 0, 1, 1], [], []>} : vector<8x64xf32>, vector<64x256xf32>, vector<8x256xf32> -> vector<8x256xf32>
    %137 = arith.addf %135, %136 : vector<8x256xf32>
    %138 = arith.negf %137 : vector<8x256xf32>
    %139 = math.exp %138 : vector<8x256xf32>
    %cst_24 = arith.constant 1.000000e+00 : f32
    %140 = vector.broadcast %cst_24 : f32 to vector<8x256xf32>
    %141 = arith.addf %140, %139 : vector<8x256xf32>
    %142 = arith.divf %140, %141 : vector<8x256xf32>
    %143 = math.tanh %137 : vector<8x256xf32>
    %144 = vector.extract_strided_slice %142 {offsets = [0, 0], sizes = [8, 64], strides = [1, 1]} : vector<8x256xf32> to vector<8x64xf32>
    %145 = vector.extract_strided_slice %142 {offsets = [0, 64], sizes = [8, 64], strides = [1, 1]} : vector<8x256xf32> to vector<8x64xf32>
    %146 = vector.extract_strided_slice %143 {offsets = [0, 128], sizes = [8, 64], strides = [1, 1]} : vector<8x256xf32> to vector<8x64xf32>
    %147 = vector.extract_strided_slice %142 {offsets = [0, 192], sizes = [8, 64], strides = [1, 1]} : vector<8x256xf32> to vector<8x64xf32>
    %148 = arith.mulf %145, %132 : vector<8x64xf32>
    %149 = arith.mulf %144, %146 : vector<8x64xf32>
    %150 = arith.addf %148, %149 : vector<8x64xf32>
    %151 = math.tanh %150 : vector<8x64xf32>
    %152 = arith.mulf %147, %151 : vector<8x64xf32>
    %153 = vector.extract_strided_slice %26 {offsets = [0, 0], sizes = [8, 32], strides = [1, 1]} : vector<8x64xf32> to vector<8x32xf32>
    %154 = vector.extract_strided_slice %44 {offsets = [0, 0], sizes = [8, 32], strides = [1, 1]} : vector<8x64xf32> to vector<8x32xf32>
    %155 = vector.extract_strided_slice %62 {offsets = [0, 0], sizes = [8, 32], strides = [1, 1]} : vector<8x64xf32> to vector<8x32xf32>
    %156 = vector.extract_strided_slice %80 {offsets = [0, 0], sizes = [8, 32], strides = [1, 1]} : vector<8x64xf32> to vector<8x32xf32>
    %157 = vector.extract_strided_slice %98 {offsets = [0, 0], sizes = [8, 32], strides = [1, 1]} : vector<8x64xf32> to vector<8x32xf32>
    %158 = vector.extract_strided_slice %116 {offsets = [0, 0], sizes = [8, 32], strides = [1, 1]} : vector<8x64xf32> to vector<8x32xf32>
    %159 = vector.extract_strided_slice %134 {offsets = [0, 0], sizes = [8, 32], strides = [1, 1]} : vector<8x64xf32> to vector<8x32xf32>
    %160 = vector.extract_strided_slice %152 {offsets = [0, 0], sizes = [8, 32], strides = [1, 1]} : vector<8x64xf32> to vector<8x32xf32>
    %161 = tpu.concatenate %153, %154, %155, %156, %157, %158, %159, %160 in 0 : vector<8x32xf32>, vector<8x32xf32>, vector<8x32xf32>, vector<8x32xf32>, vector<8x32xf32>, vector<8x32xf32>, vector<8x32xf32>, vector<8x32xf32> -> vector<64x32xf32>
    %162 = vector.extract_strided_slice %152 {offsets = [0, 32], sizes = [8, 32], strides = [1, 1]} : vector<8x64xf32> to vector<8x32xf32>
    %163 = vector.extract_strided_slice %134 {offsets = [0, 32], sizes = [8, 32], strides = [1, 1]} : vector<8x64xf32> to vector<8x32xf32>
    %164 = vector.extract_strided_slice %116 {offsets = [0, 32], sizes = [8, 32], strides = [1, 1]} : vector<8x64xf32> to vector<8x32xf32>
    %165 = vector.extract_strided_slice %98 {offsets = [0, 32], sizes = [8, 32], strides = [1, 1]} : vector<8x64xf32> to vector<8x32xf32>
    %166 = vector.extract_strided_slice %80 {offsets = [0, 32], sizes = [8, 32], strides = [1, 1]} : vector<8x64xf32> to vector<8x32xf32>
    %167 = vector.extract_strided_slice %62 {offsets = [0, 32], sizes = [8, 32], strides = [1, 1]} : vector<8x64xf32> to vector<8x32xf32>
    %168 = vector.extract_strided_slice %44 {offsets = [0, 32], sizes = [8, 32], strides = [1, 1]} : vector<8x64xf32> to vector<8x32xf32>
    %169 = vector.extract_strided_slice %26 {offsets = [0, 32], sizes = [8, 32], strides = [1, 1]} : vector<8x64xf32> to vector<8x32xf32>
    %170 = tpu.concatenate %162, %163, %164, %165, %166, %167, %168, %169 in 0 : vector<8x32xf32>, vector<8x32xf32>, vector<8x32xf32>, vector<8x32xf32>, vector<8x32xf32>, vector<8x32xf32>, vector<8x32xf32>, vector<8x32xf32> -> vector<64x32xf32>
    %171 = tpu.concatenate %161, %170 in 1 : vector<64x32xf32>, vector<64x32xf32> -> vector<64x64xf32>
    %cst_25 = arith.constant dense<0.000000e+00> : vector<64xf32>
    %172 = vector.multi_reduction <add>, %171, %cst_25 [1] : vector<64x64xf32> to vector<64xf32>
    %173 = vector.shape_cast %172 : vector<64xf32> to vector<64x1xf32>
    %cst_26 = arith.constant 6.400000e+01 : f32
    %174 = vector.broadcast %cst_26 : f32 to vector<64x1xf32>
    %175 = arith.divf %173, %174 : vector<64x1xf32>
    %176 = vector.broadcast %175 : vector<64x1xf32> to vector<64x64xf32>
    %177 = arith.subf %171, %176 : vector<64x64xf32>
    %178 = arith.mulf %177, %177 : vector<64x64xf32>
    %cst_27 = arith.constant dense<0.000000e+00> : vector<64xf32>
    %179 = vector.multi_reduction <add>, %178, %cst_27 [1] : vector<64x64xf32> to vector<64xf32>
    %180 = vector.shape_cast %179 : vector<64xf32> to vector<64x1xf32>
    %cst_28 = arith.constant 6.400000e+01 : f32
    %181 = vector.broadcast %cst_28 : f32 to vector<64x1xf32>
    %182 = arith.divf %180, %181 : vector<64x1xf32>
    %183 = vector.broadcast %175 : vector<64x1xf32> to vector<64x64xf32>
    %184 = arith.subf %171, %183 : vector<64x64xf32>
    %cst_29 = arith.constant 9.99999974E-6 : f32
    %185 = vector.broadcast %cst_29 : f32 to vector<64x1xf32>
    %186 = arith.addf %182, %185 : vector<64x1xf32>
    %187 = math.rsqrt %186 : vector<64x1xf32>
    %188 = vector.broadcast %187 : vector<64x1xf32> to vector<64x64xf32>
    %189 = arith.mulf %184, %188 : vector<64x64xf32>
    %c0_30 = arith.constant 0 : index
    %c0_31 = arith.constant 0 : index
    %190 = vector.load %arg4[%c0_30, %c0_31] : memref<1x64xf32, #tpu.memory_space<vmem>>, vector<1x64xf32>
    %191 = vector.broadcast %190 : vector<1x64xf32> to vector<64x64xf32>
    %192 = arith.mulf %189, %191 : vector<64x64xf32>
    %c0_32 = arith.constant 0 : index
    %c0_33 = arith.constant 0 : index
    %193 = vector.load %arg5[%c0_32, %c0_33] : memref<1x64xf32, #tpu.memory_space<vmem>>, vector<1x64xf32>
    %194 = vector.broadcast %193 : vector<1x64xf32> to vector<64x64xf32>
    %195 = arith.addf %192, %194 : vector<64x64xf32>
    %c0_34 = arith.constant 0 : index
    %c0_35 = arith.constant 0 : index
    %196 = vector.load %arg6[%c0_34, %c0_35] : memref<64x128xf32, #tpu.memory_space<vmem>>, vector<64x128xf32>
    %c0_36 = arith.constant 0 : index
    %c0_37 = arith.constant 0 : index
    %197 = vector.load %arg7[%c0_36, %c0_37] : memref<32x128xf32, #tpu.memory_space<vmem>>, vector<32x128xf32>
    %cst_38 = arith.constant dense<0.000000e+00> : vector<64x128xf32>
    %198 = tpu.matmul %195, %196, %cst_38 {dimension_numbers = #tpu.dot_dimension_numbers<[1], [0], [0], [1], [0, 0, 1, 1], [], []>} : vector<64x64xf32>, vector<64x128xf32>, vector<64x128xf32> -> vector<64x128xf32>
    %c0_39 = arith.constant 0 : index
    %c0_40 = arith.constant 0 : index
    %199 = vector.load %arg8[%c0_39, %c0_40] : memref<1x128xf32, #tpu.memory_space<vmem>>, vector<1x128xf32>
    %200 = vector.broadcast %199 : vector<1x128xf32> to vector<64x128xf32>
    %201 = arith.addf %198, %200 : vector<64x128xf32>
    %cst_41 = arith.constant 0.000000e+00 : f32
    %202 = vector.broadcast %cst_41 : f32 to vector<8x32xf32>
    %cst_42 = arith.constant 0.000000e+00 : f32
    %203 = vector.broadcast %cst_42 : f32 to vector<8x32xf32>
    %204 = vector.extract_strided_slice %201 {offsets = [0, 0], sizes = [8, 128], strides = [1, 1]} : vector<64x128xf32> to vector<8x128xf32>
    %cst_43 = arith.constant dense<0.000000e+00> : vector<8x128xf32>
    %205 = tpu.matmul %202, %197, %cst_43 {dimension_numbers = #tpu.dot_dimension_numbers<[1], [0], [0], [1], [0, 0, 1, 1], [], []>} : vector<8x32xf32>, vector<32x128xf32>, vector<8x128xf32> -> vector<8x128xf32>
    %206 = arith.addf %204, %205 : vector<8x128xf32>
    %207 = arith.negf %206 : vector<8x128xf32>
    %208 = math.exp %207 : vector<8x128xf32>
    %cst_44 = arith.constant 1.000000e+00 : f32
    %209 = vector.broadcast %cst_44 : f32 to vector<8x128xf32>
    %210 = arith.addf %209, %208 : vector<8x128xf32>
    %211 = arith.divf %209, %210 : vector<8x128xf32>
    %212 = math.tanh %206 : vector<8x128xf32>
    %213 = vector.extract_strided_slice %211 {offsets = [0, 32], sizes = [8, 32], strides = [1, 1]} : vector<8x128xf32> to vector<8x32xf32>
    %214 = arith.mulf %213, %203 : vector<8x32xf32>
    %215 = vector.extract_strided_slice %211 {offsets = [0, 0], sizes = [8, 32], strides = [1, 1]} : vector<8x128xf32> to vector<8x32xf32>
    %216 = vector.extract_strided_slice %212 {offsets = [0, 64], sizes = [8, 32], strides = [1, 1]} : vector<8x128xf32> to vector<8x32xf32>
    %217 = arith.mulf %215, %216 : vector<8x32xf32>
    %218 = arith.addf %214, %217 : vector<8x32xf32>
    %219 = vector.extract_strided_slice %211 {offsets = [0, 96], sizes = [8, 32], strides = [1, 1]} : vector<8x128xf32> to vector<8x32xf32>
    %220 = math.tanh %218 : vector<8x32xf32>
    %221 = arith.mulf %219, %220 : vector<8x32xf32>
    %222 = vector.extract_strided_slice %201 {offsets = [8, 0], sizes = [8, 128], strides = [1, 1]} : vector<64x128xf32> to vector<8x128xf32>
    %cst_45 = arith.constant dense<0.000000e+00> : vector<8x128xf32>
    %223 = tpu.matmul %221, %197, %cst_45 {dimension_numbers = #tpu.dot_dimension_numbers<[1], [0], [0], [1], [0, 0, 1, 1], [], []>} : vector<8x32xf32>, vector<32x128xf32>, vector<8x128xf32> -> vector<8x128xf32>
    %224 = arith.addf %222, %223 : vector<8x128xf32>
    %225 = arith.negf %224 : vector<8x128xf32>
    %226 = math.exp %225 : vector<8x128xf32>
    %cst_46 = arith.constant 1.000000e+00 : f32
    %227 = vector.broadcast %cst_46 : f32 to vector<8x128xf32>
    %228 = arith.addf %227, %226 : vector<8x128xf32>
    %229 = arith.divf %227, %228 : vector<8x128xf32>
    %230 = math.tanh %224 : vector<8x128xf32>
    %231 = vector.extract_strided_slice %229 {offsets = [0, 32], sizes = [8, 32], strides = [1, 1]} : vector<8x128xf32> to vector<8x32xf32>
    %232 = arith.mulf %231, %218 : vector<8x32xf32>
    %233 = vector.extract_strided_slice %229 {offsets = [0, 0], sizes = [8, 32], strides = [1, 1]} : vector<8x128xf32> to vector<8x32xf32>
    %234 = vector.extract_strided_slice %230 {offsets = [0, 64], sizes = [8, 32], strides = [1, 1]} : vector<8x128xf32> to vector<8x32xf32>
    %235 = arith.mulf %233, %234 : vector<8x32xf32>
    %236 = arith.addf %232, %235 : vector<8x32xf32>
    %237 = vector.extract_strided_slice %229 {offsets = [0, 96], sizes = [8, 32], strides = [1, 1]} : vector<8x128xf32> to vector<8x32xf32>
    %238 = math.tanh %236 : vector<8x32xf32>
    %239 = arith.mulf %237, %238 : vector<8x32xf32>
    %240 = vector.extract_strided_slice %201 {offsets = [16, 0], sizes = [8, 128], strides = [1, 1]} : vector<64x128xf32> to vector<8x128xf32>
    %cst_47 = arith.constant dense<0.000000e+00> : vector<8x128xf32>
    %241 = tpu.matmul %239, %197, %cst_47 {dimension_numbers = #tpu.dot_dimension_numbers<[1], [0], [0], [1], [0, 0, 1, 1], [], []>} : vector<8x32xf32>, vector<32x128xf32>, vector<8x128xf32> -> vector<8x128xf32>
    %242 = arith.addf %240, %241 : vector<8x128xf32>
    %243 = arith.negf %242 : vector<8x128xf32>
    %244 = math.exp %243 : vector<8x128xf32>
    %cst_48 = arith.constant 1.000000e+00 : f32
    %245 = vector.broadcast %cst_48 : f32 to vector<8x128xf32>
    %246 = arith.addf %245, %244 : vector<8x128xf32>
    %247 = arith.divf %245, %246 : vector<8x128xf32>
    %248 = math.tanh %242 : vector<8x128xf32>
    %249 = vector.extract_strided_slice %247 {offsets = [0, 32], sizes = [8, 32], strides = [1, 1]} : vector<8x128xf32> to vector<8x32xf32>
    %250 = arith.mulf %249, %236 : vector<8x32xf32>
    %251 = vector.extract_strided_slice %247 {offsets = [0, 0], sizes = [8, 32], strides = [1, 1]} : vector<8x128xf32> to vector<8x32xf32>
    %252 = vector.extract_strided_slice %248 {offsets = [0, 64], sizes = [8, 32], strides = [1, 1]} : vector<8x128xf32> to vector<8x32xf32>
    %253 = arith.mulf %251, %252 : vector<8x32xf32>
    %254 = arith.addf %250, %253 : vector<8x32xf32>
    %255 = vector.extract_strided_slice %247 {offsets = [0, 96], sizes = [8, 32], strides = [1, 1]} : vector<8x128xf32> to vector<8x32xf32>
    %256 = math.tanh %254 : vector<8x32xf32>
    %257 = arith.mulf %255, %256 : vector<8x32xf32>
    %258 = vector.extract_strided_slice %201 {offsets = [24, 0], sizes = [8, 128], strides = [1, 1]} : vector<64x128xf32> to vector<8x128xf32>
    %cst_49 = arith.constant dense<0.000000e+00> : vector<8x128xf32>
    %259 = tpu.matmul %257, %197, %cst_49 {dimension_numbers = #tpu.dot_dimension_numbers<[1], [0], [0], [1], [0, 0, 1, 1], [], []>} : vector<8x32xf32>, vector<32x128xf32>, vector<8x128xf32> -> vector<8x128xf32>
    %260 = arith.addf %258, %259 : vector<8x128xf32>
    %261 = arith.negf %260 : vector<8x128xf32>
    %262 = math.exp %261 : vector<8x128xf32>
    %cst_50 = arith.constant 1.000000e+00 : f32
    %263 = vector.broadcast %cst_50 : f32 to vector<8x128xf32>
    %264 = arith.addf %263, %262 : vector<8x128xf32>
    %265 = arith.divf %263, %264 : vector<8x128xf32>
    %266 = math.tanh %260 : vector<8x128xf32>
    %267 = vector.extract_strided_slice %265 {offsets = [0, 32], sizes = [8, 32], strides = [1, 1]} : vector<8x128xf32> to vector<8x32xf32>
    %268 = arith.mulf %267, %254 : vector<8x32xf32>
    %269 = vector.extract_strided_slice %265 {offsets = [0, 0], sizes = [8, 32], strides = [1, 1]} : vector<8x128xf32> to vector<8x32xf32>
    %270 = vector.extract_strided_slice %266 {offsets = [0, 64], sizes = [8, 32], strides = [1, 1]} : vector<8x128xf32> to vector<8x32xf32>
    %271 = arith.mulf %269, %270 : vector<8x32xf32>
    %272 = arith.addf %268, %271 : vector<8x32xf32>
    %273 = vector.extract_strided_slice %265 {offsets = [0, 96], sizes = [8, 32], strides = [1, 1]} : vector<8x128xf32> to vector<8x32xf32>
    %274 = math.tanh %272 : vector<8x32xf32>
    %275 = arith.mulf %273, %274 : vector<8x32xf32>
    %276 = vector.extract_strided_slice %201 {offsets = [32, 0], sizes = [8, 128], strides = [1, 1]} : vector<64x128xf32> to vector<8x128xf32>
    %cst_51 = arith.constant dense<0.000000e+00> : vector<8x128xf32>
    %277 = tpu.matmul %275, %197, %cst_51 {dimension_numbers = #tpu.dot_dimension_numbers<[1], [0], [0], [1], [0, 0, 1, 1], [], []>} : vector<8x32xf32>, vector<32x128xf32>, vector<8x128xf32> -> vector<8x128xf32>
    %278 = arith.addf %276, %277 : vector<8x128xf32>
    %279 = arith.negf %278 : vector<8x128xf32>
    %280 = math.exp %279 : vector<8x128xf32>
    %cst_52 = arith.constant 1.000000e+00 : f32
    %281 = vector.broadcast %cst_52 : f32 to vector<8x128xf32>
    %282 = arith.addf %281, %280 : vector<8x128xf32>
    %283 = arith.divf %281, %282 : vector<8x128xf32>
    %284 = math.tanh %278 : vector<8x128xf32>
    %285 = vector.extract_strided_slice %283 {offsets = [0, 32], sizes = [8, 32], strides = [1, 1]} : vector<8x128xf32> to vector<8x32xf32>
    %286 = arith.mulf %285, %272 : vector<8x32xf32>
    %287 = vector.extract_strided_slice %283 {offsets = [0, 0], sizes = [8, 32], strides = [1, 1]} : vector<8x128xf32> to vector<8x32xf32>
    %288 = vector.extract_strided_slice %284 {offsets = [0, 64], sizes = [8, 32], strides = [1, 1]} : vector<8x128xf32> to vector<8x32xf32>
    %289 = arith.mulf %287, %288 : vector<8x32xf32>
    %290 = arith.addf %286, %289 : vector<8x32xf32>
    %291 = vector.extract_strided_slice %283 {offsets = [0, 96], sizes = [8, 32], strides = [1, 1]} : vector<8x128xf32> to vector<8x32xf32>
    %292 = math.tanh %290 : vector<8x32xf32>
    %293 = arith.mulf %291, %292 : vector<8x32xf32>
    %294 = vector.extract_strided_slice %201 {offsets = [40, 0], sizes = [8, 128], strides = [1, 1]} : vector<64x128xf32> to vector<8x128xf32>
    %cst_53 = arith.constant dense<0.000000e+00> : vector<8x128xf32>
    %295 = tpu.matmul %293, %197, %cst_53 {dimension_numbers = #tpu.dot_dimension_numbers<[1], [0], [0], [1], [0, 0, 1, 1], [], []>} : vector<8x32xf32>, vector<32x128xf32>, vector<8x128xf32> -> vector<8x128xf32>
    %296 = arith.addf %294, %295 : vector<8x128xf32>
    %297 = arith.negf %296 : vector<8x128xf32>
    %298 = math.exp %297 : vector<8x128xf32>
    %cst_54 = arith.constant 1.000000e+00 : f32
    %299 = vector.broadcast %cst_54 : f32 to vector<8x128xf32>
    %300 = arith.addf %299, %298 : vector<8x128xf32>
    %301 = arith.divf %299, %300 : vector<8x128xf32>
    %302 = math.tanh %296 : vector<8x128xf32>
    %303 = vector.extract_strided_slice %301 {offsets = [0, 32], sizes = [8, 32], strides = [1, 1]} : vector<8x128xf32> to vector<8x32xf32>
    %304 = arith.mulf %303, %290 : vector<8x32xf32>
    %305 = vector.extract_strided_slice %301 {offsets = [0, 0], sizes = [8, 32], strides = [1, 1]} : vector<8x128xf32> to vector<8x32xf32>
    %306 = vector.extract_strided_slice %302 {offsets = [0, 64], sizes = [8, 32], strides = [1, 1]} : vector<8x128xf32> to vector<8x32xf32>
    %307 = arith.mulf %305, %306 : vector<8x32xf32>
    %308 = arith.addf %304, %307 : vector<8x32xf32>
    %309 = vector.extract_strided_slice %301 {offsets = [0, 96], sizes = [8, 32], strides = [1, 1]} : vector<8x128xf32> to vector<8x32xf32>
    %310 = math.tanh %308 : vector<8x32xf32>
    %311 = arith.mulf %309, %310 : vector<8x32xf32>
    %312 = vector.extract_strided_slice %201 {offsets = [48, 0], sizes = [8, 128], strides = [1, 1]} : vector<64x128xf32> to vector<8x128xf32>
    %cst_55 = arith.constant dense<0.000000e+00> : vector<8x128xf32>
    %313 = tpu.matmul %311, %197, %cst_55 {dimension_numbers = #tpu.dot_dimension_numbers<[1], [0], [0], [1], [0, 0, 1, 1], [], []>} : vector<8x32xf32>, vector<32x128xf32>, vector<8x128xf32> -> vector<8x128xf32>
    %314 = arith.addf %312, %313 : vector<8x128xf32>
    %315 = arith.negf %314 : vector<8x128xf32>
    %316 = math.exp %315 : vector<8x128xf32>
    %cst_56 = arith.constant 1.000000e+00 : f32
    %317 = vector.broadcast %cst_56 : f32 to vector<8x128xf32>
    %318 = arith.addf %317, %316 : vector<8x128xf32>
    %319 = arith.divf %317, %318 : vector<8x128xf32>
    %320 = math.tanh %314 : vector<8x128xf32>
    %321 = vector.extract_strided_slice %319 {offsets = [0, 32], sizes = [8, 32], strides = [1, 1]} : vector<8x128xf32> to vector<8x32xf32>
    %322 = arith.mulf %321, %308 : vector<8x32xf32>
    %323 = vector.extract_strided_slice %319 {offsets = [0, 0], sizes = [8, 32], strides = [1, 1]} : vector<8x128xf32> to vector<8x32xf32>
    %324 = vector.extract_strided_slice %320 {offsets = [0, 64], sizes = [8, 32], strides = [1, 1]} : vector<8x128xf32> to vector<8x32xf32>
    %325 = arith.mulf %323, %324 : vector<8x32xf32>
    %326 = arith.addf %322, %325 : vector<8x32xf32>
    %327 = vector.extract_strided_slice %319 {offsets = [0, 96], sizes = [8, 32], strides = [1, 1]} : vector<8x128xf32> to vector<8x32xf32>
    %328 = math.tanh %326 : vector<8x32xf32>
    %329 = arith.mulf %327, %328 : vector<8x32xf32>
    %330 = vector.extract_strided_slice %201 {offsets = [56, 0], sizes = [8, 128], strides = [1, 1]} : vector<64x128xf32> to vector<8x128xf32>
    %cst_57 = arith.constant dense<0.000000e+00> : vector<8x128xf32>
    %331 = tpu.matmul %329, %197, %cst_57 {dimension_numbers = #tpu.dot_dimension_numbers<[1], [0], [0], [1], [0, 0, 1, 1], [], []>} : vector<8x32xf32>, vector<32x128xf32>, vector<8x128xf32> -> vector<8x128xf32>
    %332 = arith.addf %330, %331 : vector<8x128xf32>
    %333 = arith.negf %332 : vector<8x128xf32>
    %334 = math.exp %333 : vector<8x128xf32>
    %cst_58 = arith.constant 1.000000e+00 : f32
    %335 = vector.broadcast %cst_58 : f32 to vector<8x128xf32>
    %336 = arith.addf %335, %334 : vector<8x128xf32>
    %337 = arith.divf %335, %336 : vector<8x128xf32>
    %338 = math.tanh %332 : vector<8x128xf32>
    %339 = vector.extract_strided_slice %337 {offsets = [0, 32], sizes = [8, 32], strides = [1, 1]} : vector<8x128xf32> to vector<8x32xf32>
    %340 = arith.mulf %339, %326 : vector<8x32xf32>
    %341 = vector.extract_strided_slice %337 {offsets = [0, 0], sizes = [8, 32], strides = [1, 1]} : vector<8x128xf32> to vector<8x32xf32>
    %342 = vector.extract_strided_slice %338 {offsets = [0, 64], sizes = [8, 32], strides = [1, 1]} : vector<8x128xf32> to vector<8x32xf32>
    %343 = arith.mulf %341, %342 : vector<8x32xf32>
    %344 = arith.addf %340, %343 : vector<8x32xf32>
    %345 = vector.extract_strided_slice %337 {offsets = [0, 96], sizes = [8, 32], strides = [1, 1]} : vector<8x128xf32> to vector<8x32xf32>
    %346 = math.tanh %344 : vector<8x32xf32>
    %347 = arith.mulf %345, %346 : vector<8x32xf32>
    %cst_59 = arith.constant dense<0.000000e+00> : vector<8xf32>
    %348 = vector.multi_reduction <add>, %347, %cst_59 [1] : vector<8x32xf32> to vector<8xf32>
    %349 = vector.shape_cast %348 : vector<8xf32> to vector<8x1xf32>
    %cst_60 = arith.constant 3.200000e+01 : f32
    %350 = vector.broadcast %cst_60 : f32 to vector<8x1xf32>
    %351 = arith.divf %349, %350 : vector<8x1xf32>
    %352 = vector.broadcast %351 : vector<8x1xf32> to vector<8x32xf32>
    %353 = arith.subf %347, %352 : vector<8x32xf32>
    %354 = arith.mulf %353, %353 : vector<8x32xf32>
    %cst_61 = arith.constant dense<0.000000e+00> : vector<8xf32>
    %355 = vector.multi_reduction <add>, %354, %cst_61 [1] : vector<8x32xf32> to vector<8xf32>
    %356 = vector.shape_cast %355 : vector<8xf32> to vector<8x1xf32>
    %cst_62 = arith.constant 3.200000e+01 : f32
    %357 = vector.broadcast %cst_62 : f32 to vector<8x1xf32>
    %358 = arith.divf %356, %357 : vector<8x1xf32>
    %359 = vector.broadcast %351 : vector<8x1xf32> to vector<8x32xf32>
    %360 = arith.subf %347, %359 : vector<8x32xf32>
    %cst_63 = arith.constant 9.99999974E-6 : f32
    %361 = vector.broadcast %cst_63 : f32 to vector<8x1xf32>
    %362 = arith.addf %358, %361 : vector<8x1xf32>
    %363 = math.rsqrt %362 : vector<8x1xf32>
    %364 = vector.broadcast %363 : vector<8x1xf32> to vector<8x32xf32>
    %365 = arith.mulf %360, %364 : vector<8x32xf32>
    %c0_64 = arith.constant 0 : index
    %c0_65 = arith.constant 0 : index
    %366 = vector.load %arg9[%c0_64, %c0_65] : memref<1x32xf32, #tpu.memory_space<vmem>>, vector<1x32xf32>
    %367 = vector.broadcast %366 : vector<1x32xf32> to vector<8x32xf32>
    %368 = arith.mulf %365, %367 : vector<8x32xf32>
    %c0_66 = arith.constant 0 : index
    %c0_67 = arith.constant 0 : index
    %369 = vector.load %arg10[%c0_66, %c0_67] : memref<1x32xf32, #tpu.memory_space<vmem>>, vector<1x32xf32>
    %370 = vector.broadcast %369 : vector<1x32xf32> to vector<8x32xf32>
    %371 = arith.addf %368, %370 : vector<8x32xf32>
    %c0_68 = arith.constant 0 : index
    %c0_69 = arith.constant 0 : index
    %372 = vector.load %arg11[%c0_68, %c0_69] : memref<32x32xf32, #tpu.memory_space<vmem>>, vector<32x32xf32>
    %cst_70 = arith.constant dense<0.000000e+00> : vector<8x32xf32>
    %373 = tpu.matmul %371, %372, %cst_70 {dimension_numbers = #tpu.dot_dimension_numbers<[1], [0], [0], [1], [0, 0, 1, 1], [], []>} : vector<8x32xf32>, vector<32x32xf32>, vector<8x32xf32> -> vector<8x32xf32>
    %c0_71 = arith.constant 0 : index
    %c0_72 = arith.constant 0 : index
    %374 = vector.load %arg12[%c0_71, %c0_72] : memref<1x32xf32, #tpu.memory_space<vmem>>, vector<1x32xf32>
    %375 = vector.broadcast %374 : vector<1x32xf32> to vector<8x32xf32>
    %376 = arith.addf %373, %375 : vector<8x32xf32>
    %cst_73 = arith.constant 0.000000e+00 : f32
    %377 = vector.broadcast %cst_73 : f32 to vector<8x32xf32>
    %378 = arith.maximumf %376, %377 : vector<8x32xf32>
    %c0_74 = arith.constant 0 : index
    %c0_75 = arith.constant 0 : index
    %379 = vector.load %arg13[%c0_74, %c0_75] : memref<1x32xf32, #tpu.memory_space<vmem>>, vector<1x32xf32>
    %380 = vector.broadcast %379 : vector<1x32xf32> to vector<8x32xf32>
    %381 = arith.mulf %378, %380 : vector<8x32xf32>
    %cst_76 = arith.constant dense<0.000000e+00> : vector<8xf32>
    %382 = vector.multi_reduction <add>, %381, %cst_76 [1] : vector<8x32xf32> to vector<8xf32>
    %383 = vector.shape_cast %382 : vector<8xf32> to vector<8x1xf32>
    %c0_77 = arith.constant 0 : index
    %c0_78 = arith.constant 0 : index
    %384 = vector.load %arg14[%c0_77, %c0_78] : memref<1x1xf32, #tpu.memory_space<vmem>>, vector<1x1xf32>
    %385 = vector.broadcast %384 : vector<1x1xf32> to vector<8x1xf32>
    %386 = arith.addf %383, %385 : vector<8x1xf32>
    %c0_79 = arith.constant 0 : index
    %c0_80 = arith.constant 0 : index
    %387 = vector.load %arg15[%c0_79, %c0_80] : memref<8x1xf32, #tpu.memory_space<vmem>>, vector<8x1xf32>
    tpu.vector_store %arg15[%c0_79, %c0_80], %386 {strides = array<i32>} : memref<8x1xf32, #tpu.memory_space<vmem>>, vector<8x1xf32>,
    return
  }
}

</mosaic_0001>

<llo_original>
// kernel: lstm_model_forward.1
$region0: #{lstm_model_forward.1}
  #allocation0 [shape = 'u32[]', space=smem, size = 0x4, offset = 0x4, fixed_abs, tag = 'smem constant byte address 0x4 - core index']
  #allocation1 [shape = 'u32[144,128]{1,0:T(1,128)}', space=vmem, size = 0x12000, scoped, tag = 'internal scratch']
  #allocation2 [shape = 'f32[1,1]{1,0:T(1,128)S(1)}', space=vmem, size = 0x200, scoped, tag = 'scoped memory for lstm_model_forward.1']
  %s0 = inlined_call_operand.vmem [shape: f32[64,16], index: 0, kind: input, shape index: {}]
  %s1 = inlined_call_operand.vmem [shape: f32[16,256], index: 1, kind: input, shape index: {}]
  %s2 = inlined_call_operand.vmem [shape: f32[64,256], index: 2, kind: input, shape index: {}]
  %s3 = inlined_call_operand.vmem [shape: f32[1,256], index: 3, kind: input, shape index: {}]
  %s4 = inlined_call_operand.vmem [shape: f32[1,64], index: 4, kind: input, shape index: {}]
  %s5 = inlined_call_operand.vmem [shape: f32[1,64], index: 5, kind: input, shape index: {}]
  %s6 = inlined_call_operand.vmem [shape: f32[64,128], index: 6, kind: input, shape index: {}]
  %s7 = inlined_call_operand.vmem [shape: f32[32,128], index: 7, kind: input, shape index: {}]
  %s8 = inlined_call_operand.vmem [shape: f32[1,128], index: 8, kind: input, shape index: {}]
  %s9 = inlined_call_operand.vmem [shape: f32[1,32], index: 9, kind: input, shape index: {}]
  %s10 = inlined_call_operand.vmem [shape: f32[1,32], index: 10, kind: input, shape index: {}]
  %s11 = inlined_call_operand.vmem [shape: f32[32,32], index: 11, kind: input, shape index: {}]
  %s12 = inlined_call_operand.vmem [shape: f32[1,32], index: 12, kind: input, shape index: {}]
  %s13 = inlined_call_operand.vmem [shape: f32[1,32], index: 13, kind: input, shape index: {}]
  %s14 = inlined_call_operand.<no memory space> [shape: f32[1,1], index: 14, kind: input, shape index: {}]
  %s15 = inlined_call_operand.vmem [shape: f32[8,1], index: 15, kind: output, shape index: {}]
  %s16 = sld [smem:[#allocation0]]
  $region70: #{lstm_model_forward.1} parent=0
    _
  %s18 = ssub.s32 1, %s16
  %s19 = scalar_select 0, %s18, %s16
  %v20 = vstv %s14
  %21 = vst [vmem:[#allocation2] sm:$0x1] %v20
  // Predicated region
  $region2: #{lstm_model_forward.1} parent=0 // pred_check
    _
  $region3: #{lstm_model_forward.1} parent=0 // pred_check_branch
    %23 = sbr.rel (0) target = $region5
  $region4: #{lstm_model_forward.1} parent=0 // pred_region
    _
  $region5: #{lstm_model_forward.1} parent=0 // pred_fallthru
    _
  // Predicated region
  $region6: #{lstm_model_forward.1} parent=0 // pred_check
    _
  $region7: #{lstm_model_forward.1} parent=0 // pred_check_branch
    %25 = sbr.rel (0) target = $region9
  $region8: #{lstm_model_forward.1} parent=0 // pred_region
    _
  $region9: #{lstm_model_forward.1} parent=0 // pred_fallthru
    _
  // Predicated region
  $region10: #{lstm_model_forward.1} parent=0 // pred_check
    _
  $region11: #{lstm_model_forward.1} parent=0 // pred_check_branch
    %27 = sbr.rel (0) target = $region13
  $region12: #{lstm_model_forward.1} parent=0 // pred_region
    _
  $region13: #{lstm_model_forward.1} parent=0 // pred_fallthru
    _
  // Predicated region
  $region14: #{lstm_model_forward.1} parent=0 // pred_check
    _
  $region15: #{lstm_model_forward.1} parent=0 // pred_check_branch
    %29 = sbr.rel (0) target = $region17
  $region16: #{lstm_model_forward.1} parent=0 // pred_region
    _
  $region17: #{lstm_model_forward.1} parent=0 // pred_fallthru
    _
  // Predicated region
  $region18: #{lstm_model_forward.1} parent=0 // pred_check
    _
  $region19: #{lstm_model_forward.1} parent=0 // pred_check_branch
    %31 = sbr.rel (0) target = $region21
  $region20: #{lstm_model_forward.1} parent=0 // pred_region
    _
  $region21: #{lstm_model_forward.1} parent=0 // pred_fallthru
    _
  // Predicated region
  $region22: #{lstm_model_forward.1} parent=0 // pred_check
    _
  $region23: #{lstm_model_forward.1} parent=0 // pred_check_branch
    %33 = sbr.rel (0) target = $region25
  $region24: #{lstm_model_forward.1} parent=0 // pred_region
    _
  $region25: #{lstm_model_forward.1} parent=0 // pred_fallthru
    _
  // Predicated region
  $region26: #{lstm_model_forward.1} parent=0 // pred_check
    _
  $region27: #{lstm_model_forward.1} parent=0 // pred_check_branch
    %35 = sbr.rel (0) target = $region29
  $region28: #{lstm_model_forward.1} parent=0 // pred_region
    _
  $region29: #{lstm_model_forward.1} parent=0 // pred_fallthru
    _
  // Predicated region
  $region30: #{lstm_model_forward.1} parent=0 // pred_check
    _
  $region31: #{lstm_model_forward.1} parent=0 // pred_check_branch
    %37 = sbr.rel (0) target = $region33
  $region32: #{lstm_model_forward.1} parent=0 // pred_region
    _
  $region33: #{lstm_model_forward.1} parent=0 // pred_fallthru
    _
  // Predicated region
  $region34: #{lstm_model_forward.1} parent=0 // pred_check
    _
  $region35: #{lstm_model_forward.1} parent=0 // pred_check_branch
    %39 = sbr.rel (0) target = $region37
  $region36: #{lstm_model_forward.1} parent=0 // pred_region
    _
  $region37: #{lstm_model_forward.1} parent=0 // pred_fallthru
    _
  // Predicated region
  $region38: #{lstm_model_forward.1} parent=0 // pred_check
    _
  $region39: #{lstm_model_forward.1} parent=0 // pred_check_branch
    %41 = sbr.rel (0) target = $region41
  $region40: #{lstm_model_forward.1} parent=0 // pred_region
    _
  $region41: #{lstm_model_forward.1} parent=0 // pred_fallthru
    _
  // Predicated region
  $region42: #{lstm_model_forward.1} parent=0 // pred_check
    _
  $region43: #{lstm_model_forward.1} parent=0 // pred_check_branch
    %43 = sbr.rel (0) target = $region45
  $region44: #{lstm_model_forward.1} parent=0 // pred_region
    _
  $region45: #{lstm_model_forward.1} parent=0 // pred_fallthru
    _
  // Predicated region
  $region46: #{lstm_model_forward.1} parent=0 // pred_check
    _
  $region47: #{lstm_model_forward.1} parent=0 // pred_check_branch
    %45 = sbr.rel (0) target = $region49
  $region48: #{lstm_model_forward.1} parent=0 // pred_region
    _
  $region49: #{lstm_model_forward.1} parent=0 // pred_fallthru
    _
  // Predicated region
  $region50: #{lstm_model_forward.1} parent=0 // pred_check
    _
  $region51: #{lstm_model_forward.1} parent=0 // pred_check_branch
    %47 = sbr.rel (0) target = $region53
  $region52: #{lstm_model_forward.1} parent=0 // pred_region
    _
  $region53: #{lstm_model_forward.1} parent=0 // pred_fallthru
    _
  // Predicated region
  $region54: #{lstm_model_forward.1} parent=0 // pred_check
    _
  $region55: #{lstm_model_forward.1} parent=0 // pred_check_branch
    %49 = sbr.rel (0) target = $region57
  $region56: #{lstm_model_forward.1} parent=0 // pred_region
    _
  $region57: #{lstm_model_forward.1} parent=0 // pred_fallthru
    _
  // Predicated region
  $region58: #{lstm_model_forward.1} parent=0 // pred_check
    _
  $region59: #{lstm_model_forward.1} parent=0 // pred_check_branch
    %51 = sbr.rel (0) target = $region61
  $region60: #{lstm_model_forward.1} parent=0 // pred_region
    _
  $region61: #{lstm_model_forward.1} parent=0 // pred_fallthru
    _
  %v52 = vld [vmem:[%s1] sm:$0xff]
  %v53 = vld [vmem:[%s1 + $0x8] sm:$0xff]
  %v54 = vld [vmem:[%s1 + $0x10] sm:$0xff]
  %v55 = vld [vmem:[%s1 + $0x18] sm:$0xff]
  %v56 = vld [vmem:[%s2] sm:$0xff]
  %v57 = vld [vmem:[%s2 + $0x8] sm:$0xff]
  %v58 = vld [vmem:[%s2 + $0x10] sm:$0xff]
  %v59 = vld [vmem:[%s2 + $0x18] sm:$0xff]
  %v60 = vld [vmem:[%s2 + $0x20] sm:$0xff]
  %v61 = vld [vmem:[%s2 + $0x28] sm:$0xff]
  %v62 = vld [vmem:[%s2 + $0x30] sm:$0xff]
  %v63 = vld [vmem:[%s2 + $0x38] sm:$0xff]
  %v64 = vld [vmem:[%s2 + $0x40] sm:$0xff]
  %v65 = vld [vmem:[%s2 + $0x48] sm:$0xff]
  %v66 = vld [vmem:[%s2 + $0x50] sm:$0xff]
  %v67 = vld [vmem:[%s2 + $0x58] sm:$0xff]
  %v68 = vld [vmem:[%s2 + $0x60] sm:$0xff]
  %v69 = vld [vmem:[%s2 + $0x68] sm:$0xff]
  %v70 = vld [vmem:[%s2 + $0x70] sm:$0xff]
  %v71 = vld [vmem:[%s2 + $0x78] sm:$0xff]
  %v72 = vld [vmem:[%s0] sm:$0xff]
  %v73 = vld [vmem:[%s0 + $0x8] sm:$0xff]
  %v74 = vld [vmem:[%s0 + $0x10] sm:$0xff]
  %v75 = vld [vmem:[%s0 + $0x18] sm:$0xff]
  %v76 = vld [vmem:[%s0 + $0x20] sm:$0xff]
  %v77 = vld [vmem:[%s0 + $0x28] sm:$0xff]
  %v78 = vld [vmem:[%s0 + $0x30] sm:$0xff]
  %v79 = vld [vmem:[%s0 + $0x38] sm:$0xff]
  %v80 = vld [vmem:[%s3] sm:$0x3]
  %v82 = vlaneseq
  %v83 = vshrl.u32 %v82, 7
  %v84 = vsub.s32 0, %v83
  %v85 = vrot.slane %v80, %v84
  %v86 = vlaneseq
  %v87 = vshrl.u32 %v86, 7
  %v88 = vsub.s32 1, %v87
  %v89 = vrot.slane %v80, %v88
  %vm92 = vcmask 130048
  %v94 = vsel %vm92, %v72, 0
  %v97 = vsel %vm92, %v73, 0
  %v100 = vsel %vm92, %v74, 0
  %v103 = vsel %vm92, %v75, 0
  %v106 = vsel %vm92, %v76, 0
  %v109 = vsel %vm92, %v77, 0
  %v112 = vsel %vm92, %v78, 0
  %v115 = vsel %vm92, %v79, 0
  %117 = vmatprep.subr.mxu0 0.0
  %118 = vmatpush1.msra.mxu0 0.0
  %119 = vmatprep.subr.mxu0 0.0
  %120 = vmatpush1.msra.mxu0 0.0
  %121 = vmatprep.subr.mxu0 0.0
  %122 = vmatpush1.msra.mxu0 0.0
  %123 = vmatprep.subr.mxu0 0.0
  %124 = vmatpush1.msra.mxu0 0.0
  %125 = vmatprep.subr.mxu0 0.0
  %126 = vmatpush1.msra.mxu0 0.0
  %127 = vmatprep.subr.mxu0 0.0
  %128 = vmatpush1.msra.mxu0 0.0
  %129 = vmatprep.subr.mxu0 0.0
  %130 = vmatpush1.msra.mxu0 0.0
  %131 = vmatprep.subr.mxu0 0.0
  %132 = vmatpush1.msra.mxu0 0.0
  %133 = vmatprep.subr.mxu0 0.0
  %134 = vmatpush1.msra.mxu0 0.0
  %135 = vmatprep.subr.mxu0 0.0
  %136 = vmatpush1.msra.mxu0 0.0
  %137 = vmatprep.subr.mxu0 0.0
  %138 = vmatpush1.msra.mxu0 0.0
  %139 = vmatprep.subr.mxu0 0.0
  %140 = vmatpush1.msra.mxu0 0.0
  %141 = vmatprep.subr.mxu0 0.0
  %142 = vmatpush1.msra.mxu0 0.0
  %143 = vmatprep.subr.mxu0 0.0
  %144 = vmatpush1.msra.mxu0 0.0
  %145 = vmatprep.subr.mxu0 %v55
  %146 = vmatpush1.msra.mxu0 %v54
  %147 = vmatprep.subr.mxu0 %v53
  %148 = vmatpush1.msra.mxu0 %v52
  %149 = vmatprep.subr.mxu0 0.0
  %150 = vmatpush2.msra.mxu0 0.0
  %151 = vmatprep.subr.mxu0 0.0
  %152 = vmatpush2.msra.mxu0 0.0
  %153 = vmatprep.subr.mxu0 0.0
  %154 = vmatpush2.msra.mxu0 0.0
  %155 = vmatprep.subr.mxu0 0.0
  %156 = vmatpush2.msra.mxu0 0.0
  %157 = vmatprep.subr.mxu0 0.0
  %158 = vmatpush2.msra.mxu0 0.0
  %159 = vmatprep.subr.mxu0 0.0
  %160 = vmatpush2.msra.mxu0 0.0
  %161 = vmatprep.subr.mxu0 0.0
  %162 = vmatpush2.msra.mxu0 0.0
  %163 = vmatprep.subr.mxu0 0.0
  %164 = vmatpush2.msra.mxu0 0.0
  %165 = vmatprep.subr.mxu0 0.0
  %166 = vmatpush2.msra.mxu0 0.0
  %167 = vmatprep.subr.mxu0 0.0
  %168 = vmatpush2.msra.mxu0 0.0
  %169 = vmatprep.subr.mxu0 0.0
  %170 = vmatpush2.msra.mxu0 0.0
  %171 = vmatprep.subr.mxu0 0.0
  %172 = vmatpush2.msra.mxu0 0.0
  %173 = vmatprep.subr.mxu0 0.0
  %174 = vmatpush2.msra.mxu0 0.0
  %175 = vmatprep.subr.mxu0 0.0
  %176 = vmatpush2.msra.mxu0 0.0
  %177 = vmatprep.subr.mxu0 0.0
  %178 = vmatpush2.msra.mxu0 0.0
  %179 = vmatprep.subr.mxu0 0.0
  %180 = vmatpush2.msra.mxu0 0.0
  %181 = vmatprep.mubr.f32.mxu0 0.0
  %182 = vmatmul.mubr.f32.gmra.mxu0 %v94
  %v183 = vpop.f32.mrf.mxu0
  %v184 = vadd.f32 %v85, %v183
  %v185 = vpop.f32.mrf.mxu0
  %v186 = vadd.f32 %v89, %v185
  %187 = vmatprep.mubr.f32.mxu0 0.0
  %188 = vmatmul.mubr.f32.gmra.mxu0 %v97
  %v189 = vpop.f32.mrf.mxu0
  %v190 = vadd.f32 %v85, %v189
  %v191 = vpop.f32.mrf.mxu0
  %v192 = vadd.f32 %v89, %v191
  %193 = vmatprep.mubr.f32.mxu0 0.0
  %194 = vmatmul.mubr.f32.gmra.mxu0 %v100
  %v195 = vpop.f32.mrf.mxu0
  %v196 = vadd.f32 %v85, %v195
  %v197 = vpop.f32.mrf.mxu0
  %v198 = vadd.f32 %v89, %v197
  %199 = vmatprep.mubr.f32.mxu0 0.0
  %200 = vmatmul.mubr.f32.gmra.mxu0 %v103
  %v201 = vpop.f32.mrf.mxu0
  %v202 = vadd.f32 %v85, %v201
  %v203 = vpop.f32.mrf.mxu0
  %v204 = vadd.f32 %v89, %v203
  %205 = vmatprep.mubr.f32.mxu0 0.0
  %206 = vmatmul.mubr.f32.gmra.mxu0 %v106
  %v207 = vpop.f32.mrf.mxu0
  %v208 = vadd.f32 %v85, %v207
  %v209 = vpop.f32.mrf.mxu0
  %v210 = vadd.f32 %v89, %v209
  %211 = vmatprep.mubr.f32.mxu0 0.0
  %212 = vmatmul.mubr.f32.gmra.mxu0 %v109
  %v213 = vpop.f32.mrf.mxu0
  %v214 = vadd.f32 %v85, %v213
  %v215 = vpop.f32.mrf.mxu0
  %v216 = vadd.f32 %v89, %v215
  %217 = vmatprep.mubr.f32.mxu0 0.0
  %218 = vmatmul.mubr.f32.gmra.mxu0 %v112
  %v219 = vpop.f32.mrf.mxu0
  %v220 = vadd.f32 %v85, %v219
  %v221 = vpop.f32.mrf.mxu0
  %v222 = vadd.f32 %v89, %v221
  %223 = vmatprep.mubr.f32.mxu0 0.0
  %224 = vmatmul.mubr.f32.gmra.mxu0 %v115
  %v225 = vpop.f32.mrf.mxu0
  %v226 = vadd.f32 %v85, %v225
  %v227 = vpop.f32.mrf.mxu0
  %v228 = vadd.f32 %v89, %v227
  %229 = vdwg.mxu0
  %vm230 = vcmask 523264
  %v232 = vsel %vm230, 0.0, 0
  %234 = vmatprep.subr.mxu0 0.0
  %235 = vmatpush1.msra.mxu0 0.0
  %236 = vmatprep.subr.mxu0 0.0
  %237 = vmatpush1.msra.mxu0 0.0
  %238 = vmatprep.subr.mxu0 0.0
  %239 = vmatpush1.msra.mxu0 0.0
  %240 = vmatprep.subr.mxu0 0.0
  %241 = vmatpush1.msra.mxu0 0.0
  %242 = vmatprep.subr.mxu0 0.0
  %243 = vmatpush1.msra.mxu0 0.0
  %244 = vmatprep.subr.mxu0 0.0
  %245 = vmatpush1.msra.mxu0 0.0
  %246 = vmatprep.subr.mxu0 0.0
  %247 = vmatpush1.msra.mxu0 0.0
  %248 = vmatprep.subr.mxu0 0.0
  %249 = vmatpush1.msra.mxu0 0.0
  %250 = vmatprep.subr.mxu0 %v71
  %251 = vmatpush1.msra.mxu0 %v70
  %252 = vmatprep.subr.mxu0 %v69
  %253 = vmatpush1.msra.mxu0 %v68
  %254 = vmatprep.subr.mxu0 %v67
  %255 = vmatpush1.msra.mxu0 %v66
  %256 = vmatprep.subr.mxu0 %v65
  %257 = vmatpush1.msra.mxu0 %v64
  %258 = vmatprep.subr.mxu0 %v63
  %259 = vmatpush1.msra.mxu0 %v62
  %260 = vmatprep.subr.mxu0 %v61
  %261 = vmatpush1.msra.mxu0 %v60
  %262 = vmatprep.subr.mxu0 %v59
  %263 = vmatpush1.msra.mxu0 %v58
  %264 = vmatprep.subr.mxu0 %v57
  %265 = vmatpush1.msra.mxu0 %v56
  %266 = vmatprep.subr.mxu0 0.0
  %267 = vmatpush2.msra.mxu0 0.0
  %268 = vmatprep.subr.mxu0 0.0
  %269 = vmatpush2.msra.mxu0 0.0
  %270 = vmatprep.subr.mxu0 0.0
  %271 = vmatpush2.msra.mxu0 0.0
  %272 = vmatprep.subr.mxu0 0.0
  %273 = vmatpush2.msra.mxu0 0.0
  %274 = vmatprep.subr.mxu0 0.0
  %275 = vmatpush2.msra.mxu0 0.0
  %276 = vmatprep.subr.mxu0 0.0
  %277 = vmatpush2.msra.mxu0 0.0
  %278 = vmatprep.subr.mxu0 0.0
  %279 = vmatpush2.msra.mxu0 0.0
  %280 = vmatprep.subr.mxu0 0.0
  %281 = vmatpush2.msra.mxu0 0.0
  %282 = vmatprep.subr.mxu0 0.0
  %283 = vmatpush2.msra.mxu0 0.0
  %284 = vmatprep.subr.mxu0 0.0
  %285 = vmatpush2.msra.mxu0 0.0
  %286 = vmatprep.subr.mxu0 0.0
  %287 = vmatpush2.msra.mxu0 0.0
  %288 = vmatprep.subr.mxu0 0.0
  %289 = vmatpush2.msra.mxu0 0.0
  %290 = vmatprep.subr.mxu0 0.0
  %291 = vmatpush2.msra.mxu0 0.0
  %292 = vmatprep.subr.mxu0 0.0
  %293 = vmatpush2.msra.mxu0 0.0
  %294 = vmatprep.subr.mxu0 0.0
  %295 = vmatpush2.msra.mxu0 0.0
  %296 = vmatprep.subr.mxu0 0.0
  %297 = vmatpush2.msra.mxu0 0.0
  %298 = vmatprep.mubr.f32.mxu0 0.0
  %299 = vmatmul.mubr.f32.gmra.mxu0 %v232
  %v300 = vpop.f32.mrf.mxu0
  %v301 = vadd.f32 0.0, %v300
  %v302 = vpop.f32.mrf.mxu0
  %v303 = vadd.f32 0.0, %v302
  %304 = vdwg.mxu0
  %v305 = vadd.f32 %v184, %v301
  %v306 = vadd.f32 %v186, %v303
  %v307 = vxor.u32 %v305, 2147483648
  %v308 = vxor.u32 %v306, 2147483648
  %v309 = vmul.f32 %v307, 1.442695
  %v310 = vpow.pop %v309
  %v311 = vmul.f32 %v308, 1.442695
  %v312 = vpow.pop %v311
  %v313 = vadd.f32 %v310, 1.0
  %v314 = vadd.f32 %v312, 1.0
  %v315 = vrcp.pop %v313
  %v316 = vmul.f32 1.0, %v315
  %v317 = vrcp.pop %v314
  %v318 = vmul.f32 1.0, %v317
  %v319 = vtanh.pop %v306
  %v320 = vmul.f32 %v316, 0.0
  %v321 = vmul.f32 %v316, %v319
  %323 = vrot.lane.b32.xlu0 %v321, 64
  %v324 = vpop.permute.xlu0 %323
  %v326 = vadd.f32 %v320, %v324
  %v327 = vtanh.pop %v326
  %v328 = vmul.f32 %v318, %v327
  %330 = vrot.lane.b32.xlu0 %v328, 64
  %v331 = vpop.permute.xlu0 %330
  %v332 = vsel %vm230, %v331, 0
  %334 = vmatprep.subr.mxu0 0.0
  %335 = vmatpush1.msra.mxu0 0.0
  %336 = vmatprep.subr.mxu0 0.0
  %337 = vmatpush1.msra.mxu0 0.0
  %338 = vmatprep.subr.mxu0 0.0
  %339 = vmatpush1.msra.mxu0 0.0
  %340 = vmatprep.subr.mxu0 0.0
  %341 = vmatpush1.msra.mxu0 0.0
  %342 = vmatprep.subr.mxu0 0.0
  %343 = vmatpush1.msra.mxu0 0.0
  %344 = vmatprep.subr.mxu0 0.0
  %345 = vmatpush1.msra.mxu0 0.0
  %346 = vmatprep.subr.mxu0 0.0
  %347 = vmatpush1.msra.mxu0 0.0
  %348 = vmatprep.subr.mxu0 0.0
  %349 = vmatpush1.msra.mxu0 0.0
  %350 = vmatprep.subr.mxu0 %v71
  %351 = vmatpush1.msra.mxu0 %v70
  %352 = vmatprep.subr.mxu0 %v69
  %353 = vmatpush1.msra.mxu0 %v68
  %354 = vmatprep.subr.mxu0 %v67
  %355 = vmatpush1.msra.mxu0 %v66
  %356 = vmatprep.subr.mxu0 %v65
  %357 = vmatpush1.msra.mxu0 %v64
  %358 = vmatprep.subr.mxu0 %v63
  %359 = vmatpush1.msra.mxu0 %v62
  %360 = vmatprep.subr.mxu0 %v61
  %361 = vmatpush1.msra.mxu0 %v60
  %362 = vmatprep.subr.mxu0 %v59
  %363 = vmatpush1.msra.mxu0 %v58
  %364 = vmatprep.subr.mxu0 %v57
  %365 = vmatpush1.msra.mxu0 %v56
  %366 = vmatprep.subr.mxu0 0.0
  %367 = vmatpush2.msra.mxu0 0.0
  %368 = vmatprep.subr.mxu0 0.0
  %369 = vmatpush2.msra.mxu0 0.0
  %370 = vmatprep.subr.mxu0 0.0
  %371 = vmatpush2.msra.mxu0 0.0
  %372 = vmatprep.subr.mxu0 0.0
  %373 = vmatpush2.msra.mxu0 0.0
  %374 = vmatprep.subr.mxu0 0.0
  %375 = vmatpush2.msra.mxu0 0.0
  %376 = vmatprep.subr.mxu0 0.0
  %377 = vmatpush2.msra.mxu0 0.0
  %378 = vmatprep.subr.mxu0 0.0
  %379 = vmatpush2.msra.mxu0 0.0
  %380 = vmatprep.subr.mxu0 0.0
  %381 = vmatpush2.msra.mxu0 0.0
  %382 = vmatprep.subr.mxu0 0.0
  %383 = vmatpush2.msra.mxu0 0.0
  %384 = vmatprep.subr.mxu0 0.0
  %385 = vmatpush2.msra.mxu0 0.0
  %386 = vmatprep.subr.mxu0 0.0
  %387 = vmatpush2.msra.mxu0 0.0
  %388 = vmatprep.subr.mxu0 0.0
  %389 = vmatpush2.msra.mxu0 0.0
  %390 = vmatprep.subr.mxu0 0.0
  %391 = vmatpush2.msra.mxu0 0.0
  %392 = vmatprep.subr.mxu0 0.0
  %393 = vmatpush2.msra.mxu0 0.0
  %394 = vmatprep.subr.mxu0 0.0
  %395 = vmatpush2.msra.mxu0 0.0
  %396 = vmatprep.subr.mxu0 0.0
  %397 = vmatpush2.msra.mxu0 0.0
  %398 = vmatprep.mubr.f32.mxu0 0.0
  %399 = vmatmul.mubr.f32.gmra.mxu0 %v332
  %v400 = vpop.f32.mrf.mxu0
  %v401 = vadd.f32 0.0, %v400
  %v402 = vpop.f32.mrf.mxu0
  %v403 = vadd.f32 0.0, %v402
  %404 = vdwg.mxu0
  %v405 = vadd.f32 %v190, %v401
  %v406 = vadd.f32 %v192, %v403
  %v407 = vxor.u32 %v405, 2147483648
  %v408 = vxor.u32 %v406, 2147483648
  %v409 = vmul.f32 %v407, 1.442695
  %v410 = vpow.pop %v409
  %v411 = vmul.f32 %v408, 1.442695
  %v412 = vpow.pop %v411
  %v413 = vadd.f32 %v410, 1.0
  %v414 = vadd.f32 %v412, 1.0
  %v415 = vrcp.pop %v413
  %v416 = vmul.f32 1.0, %v415
  %v417 = vrcp.pop %v414
  %v418 = vmul.f32 1.0, %v417
  %v419 = vtanh.pop %v406
  %v420 = vmul.f32 %v416, %v326
  %v421 = vmul.f32 %v416, %v419
  %423 = vrot.lane.b32.xlu0 %v421, 64
  %v424 = vpop.permute.xlu0 %423
  %v426 = vadd.f32 %v420, %v424
  %v427 = vtanh.pop %v426
  %v428 = vmul.f32 %v418, %v427
  %430 = vrot.lane.b32.xlu0 %v428, 64
  %v431 = vpop.permute.xlu0 %430
  %v432 = vsel %vm230, %v431, 0
  %434 = vmatprep.subr.mxu0 0.0
  %435 = vmatpush1.msra.mxu0 0.0
  %436 = vmatprep.subr.mxu0 0.0
  %437 = vmatpush1.msra.mxu0 0.0
  %438 = vmatprep.subr.mxu0 0.0
  %439 = vmatpush1.msra.mxu0 0.0
  %440 = vmatprep.subr.mxu0 0.0
  %441 = vmatpush1.msra.mxu0 0.0
  %442 = vmatprep.subr.mxu0 0.0
  %443 = vmatpush1.msra.mxu0 0.0
  %444 = vmatprep.subr.mxu0 0.0
  %445 = vmatpush1.msra.mxu0 0.0
  %446 = vmatprep.subr.mxu0 0.0
  %447 = vmatpush1.msra.mxu0 0.0
  %448 = vmatprep.subr.mxu0 0.0
  %449 = vmatpush1.msra.mxu0 0.0
  %450 = vmatprep.subr.mxu0 %v71
  %451 = vmatpush1.msra.mxu0 %v70
  %452 = vmatprep.subr.mxu0 %v69
  %453 = vmatpush1.msra.mxu0 %v68
  %454 = vmatprep.subr.mxu0 %v67
  %455 = vmatpush1.msra.mxu0 %v66
  %456 = vmatprep.subr.mxu0 %v65
  %457 = vmatpush1.msra.mxu0 %v64
  %458 = vmatprep.subr.mxu0 %v63
  %459 = vmatpush1.msra.mxu0 %v62
  %460 = vmatprep.subr.mxu0 %v61
  %461 = vmatpush1.msra.mxu0 %v60
  %462 = vmatprep.subr.mxu0 %v59
  %463 = vmatpush1.msra.mxu0 %v58
  %464 = vmatprep.subr.mxu0 %v57
  %465 = vmatpush1.msra.mxu0 %v56
  %466 = vmatprep.subr.mxu0 0.0
  %467 = vmatpush2.msra.mxu0 0.0
  %468 = vmatprep.subr.mxu0 0.0
  %469 = vmatpush2.msra.mxu0 0.0
  %470 = vmatprep.subr.mxu0 0.0
  %471 = vmatpush2.msra.mxu0 0.0
  %472 = vmatprep.subr.mxu0 0.0
  %473 = vmatpush2.msra.mxu0 0.0
  %474 = vmatprep.subr.mxu0 0.0
  %475 = vmatpush2.msra.mxu0 0.0
  %476 = vmatprep.subr.mxu0 0.0
  %477 = vmatpush2.msra.mxu0 0.0
  %478 = vmatprep.subr.mxu0 0.0
  %479 = vmatpush2.msra.mxu0 0.0
  %480 = vmatprep.subr.mxu0 0.0
  %481 = vmatpush2.msra.mxu0 0.0
  %482 = vmatprep.subr.mxu0 0.0
  %483 = vmatpush2.msra.mxu0 0.0
  %484 = vmatprep.subr.mxu0 0.0
  %485 = vmatpush2.msra.mxu0 0.0
  %486 = vmatprep.subr.mxu0 0.0
  %487 = vmatpush2.msra.mxu0 0.0
  %488 = vmatprep.subr.mxu0 0.0
  %489 = vmatpush2.msra.mxu0 0.0
  %490 = vmatprep.subr.mxu0 0.0
  %491 = vmatpush2.msra.mxu0 0.0
  %492 = vmatprep.subr.mxu0 0.0
  %493 = vmatpush2.msra.mxu0 0.0
  %494 = vmatprep.subr.mxu0 0.0
  %495 = vmatpush2.msra.mxu0 0.0
  %496 = vmatprep.subr.mxu0 0.0
  %497 = vmatpush2.msra.mxu0 0.0
  %498 = vmatprep.mubr.f32.mxu0 0.0
  %499 = vmatmul.mubr.f32.gmra.mxu0 %v432
  %v500 = vpop.f32.mrf.mxu0
  %v501 = vadd.f32 0.0, %v500
  %v502 = vpop.f32.mrf.mxu0
  %v503 = vadd.f32 0.0, %v502
  %504 = vdwg.mxu0
  %v505 = vadd.f32 %v196, %v501
  %v506 = vadd.f32 %v198, %v503
  %v507 = vxor.u32 %v505, 2147483648
  %v508 = vxor.u32 %v506, 2147483648
  %v509 = vmul.f32 %v507, 1.442695
  %v510 = vpow.pop %v509
  %v511 = vmul.f32 %v508, 1.442695
  %v512 = vpow.pop %v511
  %v513 = vadd.f32 %v510, 1.0
  %v514 = vadd.f32 %v512, 1.0
  %v515 = vrcp.pop %v513
  %v516 = vmul.f32 1.0, %v515
  %v517 = vrcp.pop %v514
  %v518 = vmul.f32 1.0, %v517
  %v519 = vtanh.pop %v506
  %v520 = vmul.f32 %v516, %v426
  %v521 = vmul.f32 %v516, %v519
  %523 = vrot.lane.b32.xlu0 %v521, 64
  %v524 = vpop.permute.xlu0 %523
  %v526 = vadd.f32 %v520, %v524
  %v527 = vtanh.pop %v526
  %v528 = vmul.f32 %v518, %v527
  %530 = vrot.lane.b32.xlu0 %v528, 64
  %v531 = vpop.permute.xlu0 %530
  %v532 = vsel %vm230, %v531, 0
  %534 = vmatprep.subr.mxu0 0.0
  %535 = vmatpush1.msra.mxu0 0.0
  %536 = vmatprep.subr.mxu0 0.0
  %537 = vmatpush1.msra.mxu0 0.0
  %538 = vmatprep.subr.mxu0 0.0
  %539 = vmatpush1.msra.mxu0 0.0
  %540 = vmatprep.subr.mxu0 0.0
  %541 = vmatpush1.msra.mxu0 0.0
  %542 = vmatprep.subr.mxu0 0.0
  %543 = vmatpush1.msra.mxu0 0.0
  %544 = vmatprep.subr.mxu0 0.0
  %545 = vmatpush1.msra.mxu0 0.0
  %546 = vmatprep.subr.mxu0 0.0
  %547 = vmatpush1.msra.mxu0 0.0
  %548 = vmatprep.subr.mxu0 0.0
  %549 = vmatpush1.msra.mxu0 0.0
  %550 = vmatprep.subr.mxu0 %v71
  %551 = vmatpush1.msra.mxu0 %v70
  %552 = vmatprep.subr.mxu0 %v69
  %553 = vmatpush1.msra.mxu0 %v68
  %554 = vmatprep.subr.mxu0 %v67
  %555 = vmatpush1.msra.mxu0 %v66
  %556 = vmatprep.subr.mxu0 %v65
  %557 = vmatpush1.msra.mxu0 %v64
  %558 = vmatprep.subr.mxu0 %v63
  %559 = vmatpush1.msra.mxu0 %v62
  %560 = vmatprep.subr.mxu0 %v61
  %561 = vmatpush1.msra.mxu0 %v60
  %562 = vmatprep.subr.mxu0 %v59
  %563 = vmatpush1.msra.mxu0 %v58
  %564 = vmatprep.subr.mxu0 %v57
  %565 = vmatpush1.msra.mxu0 %v56
  %566 = vmatprep.subr.mxu0 0.0
  %567 = vmatpush2.msra.mxu0 0.0
  %568 = vmatprep.subr.mxu0 0.0
  %569 = vmatpush2.msra.mxu0 0.0
  %570 = vmatprep.subr.mxu0 0.0
  %571 = vmatpush2.msra.mxu0 0.0
  %572 = vmatprep.subr.mxu0 0.0
  %573 = vmatpush2.msra.mxu0 0.0
  %574 = vmatprep.subr.mxu0 0.0
  %575 = vmatpush2.msra.mxu0 0.0
  %576 = vmatprep.subr.mxu0 0.0
  %577 = vmatpush2.msra.mxu0 0.0
  %578 = vmatprep.subr.mxu0 0.0
  %579 = vmatpush2.msra.mxu0 0.0
  %580 = vmatprep.subr.mxu0 0.0
  %581 = vmatpush2.msra.mxu0 0.0
  %582 = vmatprep.subr.mxu0 0.0
  %583 = vmatpush2.msra.mxu0 0.0
  %584 = vmatprep.subr.mxu0 0.0
  %585 = vmatpush2.msra.mxu0 0.0
  %586 = vmatprep.subr.mxu0 0.0
  %587 = vmatpush2.msra.mxu0 0.0
  %588 = vmatprep.subr.mxu0 0.0
  %589 = vmatpush2.msra.mxu0 0.0
  %590 = vmatprep.subr.mxu0 0.0
  %591 = vmatpush2.msra.mxu0 0.0
  %592 = vmatprep.subr.mxu0 0.0
  %593 = vmatpush2.msra.mxu0 0.0
  %594 = vmatprep.subr.mxu0 0.0
  %595 = vmatpush2.msra.mxu0 0.0
  %596 = vmatprep.subr.mxu0 0.0
  %597 = vmatpush2.msra.mxu0 0.0
  %598 = vmatprep.mubr.f32.mxu0 0.0
  %599 = vmatmul.mubr.f32.gmra.mxu0 %v532
  %v600 = vpop.f32.mrf.mxu0
  %v601 = vadd.f32 0.0, %v600
  %v602 = vpop.f32.mrf.mxu0
  %v603 = vadd.f32 0.0, %v602
  %604 = vdwg.mxu0
  %v605 = vadd.f32 %v202, %v601
  %v606 = vadd.f32 %v204, %v603
  %v607 = vxor.u32 %v605, 2147483648
  %v608 = vxor.u32 %v606, 2147483648
  %v609 = vmul.f32 %v607, 1.442695
  %v610 = vpow.pop %v609
  %v611 = vmul.f32 %v608, 1.442695
  %v612 = vpow.pop %v611
  %v613 = vadd.f32 %v610, 1.0
  %v614 = vadd.f32 %v612, 1.0
  %v615 = vrcp.pop %v613
  %v616 = vmul.f32 1.0, %v615
  %v617 = vrcp.pop %v614
  %v618 = vmul.f32 1.0, %v617
  %v619 = vtanh.pop %v606
  %v620 = vmul.f32 %v616, %v526
  %v621 = vmul.f32 %v616, %v619
  %623 = vrot.lane.b32.xlu0 %v621, 64
  %v624 = vpop.permute.xlu0 %623
  %v626 = vadd.f32 %v620, %v624
  %v627 = vtanh.pop %v626
  %v628 = vmul.f32 %v618, %v627
  %630 = vrot.lane.b32.xlu0 %v628, 64
  %v631 = vpop.permute.xlu0 %630
  %v632 = vsel %vm230, %v631, 0
  %634 = vmatprep.subr.mxu0 0.0
  %635 = vmatpush1.msra.mxu0 0.0
  %636 = vmatprep.subr.mxu0 0.0
  %637 = vmatpush1.msra.mxu0 0.0
  %638 = vmatprep.subr.mxu0 0.0
  %639 = vmatpush1.msra.mxu0 0.0
  %640 = vmatprep.subr.mxu0 0.0
  %641 = vmatpush1.msra.mxu0 0.0
  %642 = vmatprep.subr.mxu0 0.0
  %643 = vmatpush1.msra.mxu0 0.0
  %644 = vmatprep.subr.mxu0 0.0
  %645 = vmatpush1.msra.mxu0 0.0
  %646 = vmatprep.subr.mxu0 0.0
  %647 = vmatpush1.msra.mxu0 0.0
  %648 = vmatprep.subr.mxu0 0.0
  %649 = vmatpush1.msra.mxu0 0.0
  %650 = vmatprep.subr.mxu0 %v71
  %651 = vmatpush1.msra.mxu0 %v70
  %652 = vmatprep.subr.mxu0 %v69
  %653 = vmatpush1.msra.mxu0 %v68
  %654 = vmatprep.subr.mxu0 %v67
  %655 = vmatpush1.msra.mxu0 %v66
  %656 = vmatprep.subr.mxu0 %v65
  %657 = vmatpush1.msra.mxu0 %v64
  %658 = vmatprep.subr.mxu0 %v63
  %659 = vmatpush1.msra.mxu0 %v62
  %660 = vmatprep.subr.mxu0 %v61
  %661 = vmatpush1.msra.mxu0 %v60
  %662 = vmatprep.subr.mxu0 %v59
  %663 = vmatpush1.msra.mxu0 %v58
  %664 = vmatprep.subr.mxu0 %v57
  %665 = vmatpush1.msra.mxu0 %v56
  %666 = vmatprep.subr.mxu0 0.0
  %667 = vmatpush2.msra.mxu0 0.0
  %668 = vmatprep.subr.mxu0 0.0
  %669 = vmatpush2.msra.mxu0 0.0
  %670 = vmatprep.subr.mxu0 0.0
  %671 = vmatpush2.msra.mxu0 0.0
  %672 = vmatprep.subr.mxu0 0.0
  %673 = vmatpush2.msra.mxu0 0.0
  %674 = vmatprep.subr.mxu0 0.0
  %675 = vmatpush2.msra.mxu0 0.0
  %676 = vmatprep.subr.mxu0 0.0
  %677 = vmatpush2.msra.mxu0 0.0
  %678 = vmatprep.subr.mxu0 0.0
  %679 = vmatpush2.msra.mxu0 0.0
  %680 = vmatprep.subr.mxu0 0.0
  %681 = vmatpush2.msra.mxu0 0.0
  %682 = vmatprep.subr.mxu0 0.0
  %683 = vmatpush2.msra.mxu0 0.0
  %684 = vmatprep.subr.mxu0 0.0
  %685 = vmatpush2.msra.mxu0 0.0
  %686 = vmatprep.subr.mxu0 0.0
  %687 = vmatpush2.msra.mxu0 0.0
  %688 = vmatprep.subr.mxu0 0.0
  %689 = vmatpush2.msra.mxu0 0.0
  %690 = vmatprep.subr.mxu0 0.0
  %691 = vmatpush2.msra.mxu0 0.0
  %692 = vmatprep.subr.mxu0 0.0
  %693 = vmatpush2.msra.mxu0 0.0
  %694 = vmatprep.subr.mxu0 0.0
  %695 = vmatpush2.msra.mxu0 0.0
  %696 = vmatprep.subr.mxu0 0.0
  %697 = vmatpush2.msra.mxu0 0.0
  %698 = vmatprep.mubr.f32.mxu0 0.0
  %699 = vmatmul.mubr.f32.gmra.mxu0 %v632
  %v700 = vpop.f32.mrf.mxu0
  %v701 = vadd.f32 0.0, %v700
  %v702 = vpop.f32.mrf.mxu0
  %v703 = vadd.f32 0.0, %v702
  %704 = vdwg.mxu0
  %v705 = vadd.f32 %v208, %v701
  %v706 = vadd.f32 %v210, %v703
  %v707 = vxor.u32 %v705, 2147483648
  %v708 = vxor.u32 %v706, 2147483648
  %v709 = vmul.f32 %v707, 1.442695
  %v710 = vpow.pop %v709
  %v711 = vmul.f32 %v708, 1.442695
  %v712 = vpow.pop %v711
  %v713 = vadd.f32 %v710, 1.0
  %v714 = vadd.f32 %v712, 1.0
  %v715 = vrcp.pop %v713
  %v716 = vmul.f32 1.0, %v715
  %v717 = vrcp.pop %v714
  %v718 = vmul.f32 1.0, %v717
  %v719 = vtanh.pop %v706
  %v720 = vmul.f32 %v716, %v626
  %v721 = vmul.f32 %v716, %v719
  %723 = vrot.lane.b32.xlu0 %v721, 64
  %v724 = vpop.permute.xlu0 %723
  %v726 = vadd.f32 %v720, %v724
  %v727 = vtanh.pop %v726
  %v728 = vmul.f32 %v718, %v727
  %730 = vrot.lane.b32.xlu0 %v728, 64
  %v731 = vpop.permute.xlu0 %730
  %v732 = vsel %vm230, %v731, 0
  %734 = vmatprep.subr.mxu0 0.0
  %735 = vmatpush1.msra.mxu0 0.0
  %736 = vmatprep.subr.mxu0 0.0
  %737 = vmatpush1.msra.mxu0 0.0
  %738 = vmatprep.subr.mxu0 0.0
  %739 = vmatpush1.msra.mxu0 0.0
  %740 = vmatprep.subr.mxu0 0.0
  %741 = vmatpush1.msra.mxu0 0.0
  %742 = vmatprep.subr.mxu0 0.0
  %743 = vmatpush1.msra.mxu0 0.0
  %744 = vmatprep.subr.mxu0 0.0
  %745 = vmatpush1.msra.mxu0 0.0
  %746 = vmatprep.subr.mxu0 0.0
  %747 = vmatpush1.msra.mxu0 0.0
  %748 = vmatprep.subr.mxu0 0.0
  %749 = vmatpush1.msra.mxu0 0.0
  %750 = vmatprep.subr.mxu0 %v71
  %751 = vmatpush1.msra.mxu0 %v70
  %752 = vmatprep.subr.mxu0 %v69
  %753 = vmatpush1.msra.mxu0 %v68
  %754 = vmatprep.subr.mxu0 %v67
  %755 = vmatpush1.msra.mxu0 %v66
  %756 = vmatprep.subr.mxu0 %v65
  %757 = vmatpush1.msra.mxu0 %v64
  %758 = vmatprep.subr.mxu0 %v63
  %759 = vmatpush1.msra.mxu0 %v62
  %760 = vmatprep.subr.mxu0 %v61
  %761 = vmatpush1.msra.mxu0 %v60
  %762 = vmatprep.subr.mxu0 %v59
  %763 = vmatpush1.msra.mxu0 %v58
  %764 = vmatprep.subr.mxu0 %v57
  %765 = vmatpush1.msra.mxu0 %v56
  %766 = vmatprep.subr.mxu0 0.0
  %767 = vmatpush2.msra.mxu0 0.0
  %768 = vmatprep.subr.mxu0 0.0
  %769 = vmatpush2.msra.mxu0 0.0
  %770 = vmatprep.subr.mxu0 0.0
  %771 = vmatpush2.msra.mxu0 0.0
  %772 = vmatprep.subr.mxu0 0.0
  %773 = vmatpush2.msra.mxu0 0.0
  %774 = vmatprep.subr.mxu0 0.0
  %775 = vmatpush2.msra.mxu0 0.0
  %776 = vmatprep.subr.mxu0 0.0
  %777 = vmatpush2.msra.mxu0 0.0
  %778 = vmatprep.subr.mxu0 0.0
  %779 = vmatpush2.msra.mxu0 0.0
  %780 = vmatprep.subr.mxu0 0.0
  %781 = vmatpush2.msra.mxu0 0.0
  %782 = vmatprep.subr.mxu0 0.0
  %783 = vmatpush2.msra.mxu0 0.0
  %784 = vmatprep.subr.mxu0 0.0
  %785 = vmatpush2.msra.mxu0 0.0
  %786 = vmatprep.subr.mxu0 0.0
  %787 = vmatpush2.msra.mxu0 0.0
  %788 = vmatprep.subr.mxu0 0.0
  %789 = vmatpush2.msra.mxu0 0.0
  %790 = vmatprep.subr.mxu0 0.0
  %791 = vmatpush2.msra.mxu0 0.0
  %792 = vmatprep.subr.mxu0 0.0
  %793 = vmatpush2.msra.mxu0 0.0
  %794 = vmatprep.subr.mxu0 0.0
  %795 = vmatpush2.msra.mxu0 0.0
  %796 = vmatprep.subr.mxu0 0.0
  %797 = vmatpush2.msra.mxu0 0.0
  %798 = vmatprep.mubr.f32.mxu0 0.0
  %799 = vmatmul.mubr.f32.gmra.mxu0 %v732
  %v800 = vpop.f32.mrf.mxu0
  %v801 = vadd.f32 0.0, %v800
  %v802 = vpop.f32.mrf.mxu0
  %v803 = vadd.f32 0.0, %v802
  %804 = vdwg.mxu0
  %v805 = vadd.f32 %v214, %v801
  %v806 = vadd.f32 %v216, %v803
  %v807 = vxor.u32 %v805, 2147483648
  %v808 = vxor.u32 %v806, 2147483648
  %v809 = vmul.f32 %v807, 1.442695
  %v810 = vpow.pop %v809
  %v811 = vmul.f32 %v808, 1.442695
  %v812 = vpow.pop %v811
  %v813 = vadd.f32 %v810, 1.0
  %v814 = vadd.f32 %v812, 1.0
  %v815 = vrcp.pop %v813
  %v816 = vmul.f32 1.0, %v815
  %v817 = vrcp.pop %v814
  %v818 = vmul.f32 1.0, %v817
  %v819 = vtanh.pop %v806
  %v820 = vmul.f32 %v816, %v726
  %v821 = vmul.f32 %v816, %v819
  %823 = vrot.lane.b32.xlu0 %v821, 64
  %v824 = vpop.permute.xlu0 %823
  %v826 = vadd.f32 %v820, %v824
  %v827 = vtanh.pop %v826
  %v828 = vmul.f32 %v818, %v827
  %830 = vrot.lane.b32.xlu0 %v828, 64
  %v831 = vpop.permute.xlu0 %830
  %v832 = vsel %vm230, %v831, 0
  %834 = vmatprep.subr.mxu0 0.0
  %835 = vmatpush1.msra.mxu0 0.0
  %836 = vmatprep.subr.mxu0 0.0
  %837 = vmatpush1.msra.mxu0 0.0
  %838 = vmatprep.subr.mxu0 0.0
  %839 = vmatpush1.msra.mxu0 0.0
  %840 = vmatprep.subr.mxu0 0.0
  %841 = vmatpush1.msra.mxu0 0.0
  %842 = vmatprep.subr.mxu0 0.0
  %843 = vmatpush1.msra.mxu0 0.0
  %844 = vmatprep.subr.mxu0 0.0
  %845 = vmatpush1.msra.mxu0 0.0
  %846 = vmatprep.subr.mxu0 0.0
  %847 = vmatpush1.msra.mxu0 0.0
  %848 = vmatprep.subr.mxu0 0.0
  %849 = vmatpush1.msra.mxu0 0.0
  %850 = vmatprep.subr.mxu0 %v71
  %851 = vmatpush1.msra.mxu0 %v70
  %852 = vmatprep.subr.mxu0 %v69
  %853 = vmatpush1.msra.mxu0 %v68
  %854 = vmatprep.subr.mxu0 %v67
  %855 = vmatpush1.msra.mxu0 %v66
  %856 = vmatprep.subr.mxu0 %v65
  %857 = vmatpush1.msra.mxu0 %v64
  %858 = vmatprep.subr.mxu0 %v63
  %859 = vmatpush1.msra.mxu0 %v62
  %860 = vmatprep.subr.mxu0 %v61
  %861 = vmatpush1.msra.mxu0 %v60
  %862 = vmatprep.subr.mxu0 %v59
  %863 = vmatpush1.msra.mxu0 %v58
  %864 = vmatprep.subr.mxu0 %v57
  %865 = vmatpush1.msra.mxu0 %v56
  %866 = vmatprep.subr.mxu0 0.0
  %867 = vmatpush2.msra.mxu0 0.0
  %868 = vmatprep.subr.mxu0 0.0
  %869 = vmatpush2.msra.mxu0 0.0
  %870 = vmatprep.subr.mxu0 0.0
  %871 = vmatpush2.msra.mxu0 0.0
  %872 = vmatprep.subr.mxu0 0.0
  %873 = vmatpush2.msra.mxu0 0.0
  %874 = vmatprep.subr.mxu0 0.0
  %875 = vmatpush2.msra.mxu0 0.0
  %876 = vmatprep.subr.mxu0 0.0
  %877 = vmatpush2.msra.mxu0 0.0
  %878 = vmatprep.subr.mxu0 0.0
  %879 = vmatpush2.msra.mxu0 0.0
  %880 = vmatprep.subr.mxu0 0.0
  %881 = vmatpush2.msra.mxu0 0.0
  %882 = vmatprep.subr.mxu0 0.0
  %883 = vmatpush2.msra.mxu0 0.0
  %884 = vmatprep.subr.mxu0 0.0
  %885 = vmatpush2.msra.mxu0 0.0
  %886 = vmatprep.subr.mxu0 0.0
  %887 = vmatpush2.msra.mxu0 0.0
  %888 = vmatprep.subr.mxu0 0.0
  %889 = vmatpush2.msra.mxu0 0.0
  %890 = vmatprep.subr.mxu0 0.0
  %891 = vmatpush2.msra.mxu0 0.0
  %892 = vmatprep.subr.mxu0 0.0
  %893 = vmatpush2.msra.mxu0 0.0
  %894 = vmatprep.subr.mxu0 0.0
  %895 = vmatpush2.msra.mxu0 0.0
  %896 = vmatprep.subr.mxu0 0.0
  %897 = vmatpush2.msra.mxu0 0.0
  %898 = vmatprep.mubr.f32.mxu0 0.0
  %899 = vmatmul.mubr.f32.gmra.mxu0 %v832
  %v900 = vpop.f32.mrf.mxu0
  %v901 = vadd.f32 0.0, %v900
  %v902 = vpop.f32.mrf.mxu0
  %v903 = vadd.f32 0.0, %v902
  %904 = vdwg.mxu0
  %v905 = vadd.f32 %v220, %v901
  %v906 = vadd.f32 %v222, %v903
  %v907 = vxor.u32 %v905, 2147483648
  %v908 = vxor.u32 %v906, 2147483648
  %v909 = vmul.f32 %v907, 1.442695
  %v910 = vpow.pop %v909
  %v911 = vmul.f32 %v908, 1.442695
  %v912 = vpow.pop %v911
  %v913 = vadd.f32 %v910, 1.0
  %v914 = vadd.f32 %v912, 1.0
  %v915 = vrcp.pop %v913
  %v916 = vmul.f32 1.0, %v915
  %v917 = vrcp.pop %v914
  %v918 = vmul.f32 1.0, %v917
  %v919 = vtanh.pop %v906
  %v920 = vmul.f32 %v916, %v826
  %v921 = vmul.f32 %v916, %v919
  %923 = vrot.lane.b32.xlu0 %v921, 64
  %v924 = vpop.permute.xlu0 %923
  %v926 = vadd.f32 %v920, %v924
  %v927 = vtanh.pop %v926
  %v928 = vmul.f32 %v918, %v927
  %930 = vrot.lane.b32.xlu0 %v928, 64
  %v931 = vpop.permute.xlu0 %930
  %v932 = vsel %vm230, %v931, 0
  %934 = vmatprep.subr.mxu0 0.0
  %935 = vmatpush1.msra.mxu0 0.0
  %936 = vmatprep.subr.mxu0 0.0
  %937 = vmatpush1.msra.mxu0 0.0
  %938 = vmatprep.subr.mxu0 0.0
  %939 = vmatpush1.msra.mxu0 0.0
  %940 = vmatprep.subr.mxu0 0.0
  %941 = vmatpush1.msra.mxu0 0.0
  %942 = vmatprep.subr.mxu0 0.0
  %943 = vmatpush1.msra.mxu0 0.0
  %944 = vmatprep.subr.mxu0 0.0
  %945 = vmatpush1.msra.mxu0 0.0
  %946 = vmatprep.subr.mxu0 0.0
  %947 = vmatpush1.msra.mxu0 0.0
  %948 = vmatprep.subr.mxu0 0.0
  %949 = vmatpush1.msra.mxu0 0.0
  %950 = vmatprep.subr.mxu0 %v71
  %951 = vmatpush1.msra.mxu0 %v70
  %952 = vmatprep.subr.mxu0 %v69
  %953 = vmatpush1.msra.mxu0 %v68
  %954 = vmatprep.subr.mxu0 %v67
  %955 = vmatpush1.msra.mxu0 %v66
  %956 = vmatprep.subr.mxu0 %v65
  %957 = vmatpush1.msra.mxu0 %v64
  %958 = vmatprep.subr.mxu0 %v63
  %959 = vmatpush1.msra.mxu0 %v62
  %960 = vmatprep.subr.mxu0 %v61
  %961 = vmatpush1.msra.mxu0 %v60
  %962 = vmatprep.subr.mxu0 %v59
  %963 = vmatpush1.msra.mxu0 %v58
  %964 = vmatprep.subr.mxu0 %v57
  %965 = vmatpush1.msra.mxu0 %v56
  %966 = vmatprep.subr.mxu0 0.0
  %967 = vmatpush2.msra.mxu0 0.0
  %968 = vmatprep.subr.mxu0 0.0
  %969 = vmatpush2.msra.mxu0 0.0
  %970 = vmatprep.subr.mxu0 0.0
  %971 = vmatpush2.msra.mxu0 0.0
  %972 = vmatprep.subr.mxu0 0.0
  %973 = vmatpush2.msra.mxu0 0.0
  %974 = vmatprep.subr.mxu0 0.0
  %975 = vmatpush2.msra.mxu0 0.0
  %976 = vmatprep.subr.mxu0 0.0
  %977 = vmatpush2.msra.mxu0 0.0
  %978 = vmatprep.subr.mxu0 0.0
  %979 = vmatpush2.msra.mxu0 0.0
  %980 = vmatprep.subr.mxu0 0.0
  %981 = vmatpush2.msra.mxu0 0.0
  %982 = vmatprep.subr.mxu0 0.0
  %983 = vmatpush2.msra.mxu0 0.0
  %984 = vmatprep.subr.mxu0 0.0
  %985 = vmatpush2.msra.mxu0 0.0
  %986 = vmatprep.subr.mxu0 0.0
  %987 = vmatpush2.msra.mxu0 0.0
  %988 = vmatprep.subr.mxu0 0.0
  %989 = vmatpush2.msra.mxu0 0.0
  %990 = vmatprep.subr.mxu0 0.0
  %991 = vmatpush2.msra.mxu0 0.0
  %992 = vmatprep.subr.mxu0 0.0
  %993 = vmatpush2.msra.mxu0 0.0
  %994 = vmatprep.subr.mxu0 0.0
  %995 = vmatpush2.msra.mxu0 0.0
  %996 = vmatprep.subr.mxu0 0.0
  %997 = vmatpush2.msra.mxu0 0.0
  %998 = vmatprep.mubr.f32.mxu0 0.0
  %999 = vmatmul.mubr.f32.gmra.mxu0 %v932
  %v1000 = vpop.f32.mrf.mxu0
  %v1001 = vadd.f32 0.0, %v1000
  %v1002 = vpop.f32.mrf.mxu0
  %v1003 = vadd.f32 0.0, %v1002
  %1004 = vdwg.mxu0
  %v1005 = vadd.f32 %v226, %v1001
  %v1006 = vadd.f32 %v228, %v1003
  %v1007 = vxor.u32 %v1005, 2147483648
  %v1008 = vxor.u32 %v1006, 2147483648
  %v1009 = vmul.f32 %v1007, 1.442695
  %v1010 = vpow.pop %v1009
  %v1011 = vmul.f32 %v1008, 1.442695
  %v1012 = vpow.pop %v1011
  %v1013 = vadd.f32 %v1010, 1.0
  %v1014 = vadd.f32 %v1012, 1.0
  %v1015 = vrcp.pop %v1013
  %v1016 = vmul.f32 1.0, %v1015
  %v1017 = vrcp.pop %v1014
  %v1018 = vmul.f32 1.0, %v1017
  %v1019 = vtanh.pop %v1006
  %v1020 = vmul.f32 %v1016, %v926
  %v1021 = vmul.f32 %v1016, %v1019
  %1023 = vrot.lane.b32.xlu0 %v1021, 64
  %v1024 = vpop.permute.xlu0 %1023
  %v1026 = vadd.f32 %v1020, %v1024
  %v1027 = vtanh.pop %v1026
  %v1028 = vmul.f32 %v1018, %v1027
  %1030 = vrot.lane.b32.xlu0 %v1028, 64
  %v1031 = vpop.permute.xlu0 %1030
  %vm1040 = vcmask 261120
  %v1041 = vsel %vm1040, %v331, %v1031
  %v1042 = vsel %vm1040, %v431, %v931
  %v1043 = vsel %vm1040, %v531, %v831
  %v1044 = vsel %vm1040, %v631, %v731
  %v1045 = vsel %vm1040, %v731, %v631
  %v1046 = vsel %vm1040, %v831, %v531
  %v1047 = vsel %vm1040, %v931, %v431
  %v1048 = vsel %vm1040, %v1031, %v331
  %v1049 = vsel %vm230, %v1041, 0.0
  %1050 = vadd.xlane.f32.xlu0 %v1049
  %v1051 = vpop.xlane.xlu0 %1050
  %v1052 = vsel %vm230, %v1042, 0.0
  %1053 = vadd.xlane.f32.xlu0 %v1052
  %v1054 = vpop.xlane.xlu0 %1053
  %v1055 = vsel %vm230, %v1043, 0.0
  %1056 = vadd.xlane.f32.xlu0 %v1055
  %v1057 = vpop.xlane.xlu0 %1056
  %v1058 = vsel %vm230, %v1044, 0.0
  %1059 = vadd.xlane.f32.xlu0 %v1058
  %v1060 = vpop.xlane.xlu0 %1059
  %v1061 = vsel %vm230, %v1045, 0.0
  %1062 = vadd.xlane.f32.xlu0 %v1061
  %v1063 = vpop.xlane.xlu0 %1062
  %v1064 = vsel %vm230, %v1046, 0.0
  %1065 = vadd.xlane.f32.xlu0 %v1064
  %v1066 = vpop.xlane.xlu0 %1065
  %v1067 = vsel %vm230, %v1047, 0.0
  %1068 = vadd.xlane.f32.xlu0 %v1067
  %v1069 = vpop.xlane.xlu0 %1068
  %v1070 = vsel %vm230, %v1048, 0.0
  %1071 = vadd.xlane.f32.xlu0 %v1070
  %v1072 = vpop.xlane.xlu0 %1071
  %v1073 = vrcp.pop 64.0
  %v1074 = vmul.f32 %v1051, %v1073
  %v1075 = vmul.f32 %v1054, %v1073
  %v1076 = vmul.f32 %v1057, %v1073
  %v1077 = vmul.f32 %v1060, %v1073
  %v1078 = vmul.f32 %v1063, %v1073
  %v1079 = vmul.f32 %v1066, %v1073
  %v1080 = vmul.f32 %v1069, %v1073
  %v1081 = vmul.f32 %v1072, %v1073
  %v1082 = vsub.f32 %v1041, %v1074
  %v1083 = vsub.f32 %v1042, %v1075
  %v1084 = vsub.f32 %v1043, %v1076
  %v1085 = vsub.f32 %v1044, %v1077
  %v1086 = vsub.f32 %v1045, %v1078
  %v1087 = vsub.f32 %v1046, %v1079
  %v1088 = vsub.f32 %v1047, %v1080
  %v1089 = vsub.f32 %v1048, %v1081
  %v1090 = vmul.f32 %v1082, %v1082
  %v1091 = vmul.f32 %v1083, %v1083
  %v1092 = vmul.f32 %v1084, %v1084
  %v1093 = vmul.f32 %v1085, %v1085
  %v1094 = vmul.f32 %v1086, %v1086
  %v1095 = vmul.f32 %v1087, %v1087
  %v1096 = vmul.f32 %v1088, %v1088
  %v1097 = vmul.f32 %v1089, %v1089
  %v1098 = vsel %vm230, %v1090, 0.0
  %1099 = vadd.xlane.f32.xlu0 %v1098
  %v1100 = vpop.xlane.xlu0 %1099
  %v1101 = vsel %vm230, %v1091, 0.0
  %1102 = vadd.xlane.f32.xlu0 %v1101
  %v1103 = vpop.xlane.xlu0 %1102
  %v1104 = vsel %vm230, %v1092, 0.0
  %1105 = vadd.xlane.f32.xlu0 %v1104
  %v1106 = vpop.xlane.xlu0 %1105
  %v1107 = vsel %vm230, %v1093, 0.0
  %1108 = vadd.xlane.f32.xlu0 %v1107
  %v1109 = vpop.xlane.xlu0 %1108
  %v1110 = vsel %vm230, %v1094, 0.0
  %1111 = vadd.xlane.f32.xlu0 %v1110
  %v1112 = vpop.xlane.xlu0 %1111
  %v1113 = vsel %vm230, %v1095, 0.0
  %1114 = vadd.xlane.f32.xlu0 %v1113
  %v1115 = vpop.xlane.xlu0 %1114
  %v1116 = vsel %vm230, %v1096, 0.0
  %1117 = vadd.xlane.f32.xlu0 %v1116
  %v1118 = vpop.xlane.xlu0 %1117
  %v1119 = vsel %vm230, %v1097, 0.0
  %1120 = vadd.xlane.f32.xlu0 %v1119
  %v1121 = vpop.xlane.xlu0 %1120
  %v1122 = vmul.f32 %v1100, %v1073
  %v1123 = vmul.f32 %v1103, %v1073
  %v1124 = vmul.f32 %v1106, %v1073
  %v1125 = vmul.f32 %v1109, %v1073
  %v1126 = vmul.f32 %v1112, %v1073
  %v1127 = vmul.f32 %v1115, %v1073
  %v1128 = vmul.f32 %v1118, %v1073
  %v1129 = vmul.f32 %v1121, %v1073
  %v1130 = vadd.f32 %v1122, 1e-05
  %v1131 = vadd.f32 %v1123, 1e-05
  %v1132 = vadd.f32 %v1124, 1e-05
  %v1133 = vadd.f32 %v1125, 1e-05
  %v1134 = vadd.f32 %v1126, 1e-05
  %v1135 = vadd.f32 %v1127, 1e-05
  %v1136 = vadd.f32 %v1128, 1e-05
  %v1137 = vadd.f32 %v1129, 1e-05
  %v1138 = vrsqrt.pop %v1130
  %v1139 = vrsqrt.pop %v1131
  %v1140 = vrsqrt.pop %v1132
  %v1141 = vrsqrt.pop %v1133
  %v1142 = vrsqrt.pop %v1134
  %v1143 = vrsqrt.pop %v1135
  %v1144 = vrsqrt.pop %v1136
  %v1145 = vrsqrt.pop %v1137
  %v1146 = vmul.f32 %v1082, %v1138
  %v1147 = vmul.f32 %v1083, %v1139
  %v1148 = vmul.f32 %v1084, %v1140
  %v1149 = vmul.f32 %v1085, %v1141
  %v1150 = vmul.f32 %v1086, %v1142
  %v1151 = vmul.f32 %v1087, %v1143
  %v1152 = vmul.f32 %v1088, %v1144
  %v1153 = vmul.f32 %v1089, %v1145
  %v1154 = vld [vmem:[%s4] sm:$0x1]
  %v1156 = vlaneseq
  %v1157 = vshrl.u32 %v1156, 7
  %v1158 = vsub.s32 0, %v1157
  %v1159 = vrot.slane %v1154, %v1158
  %v1161 = vmul.f32 %v1146, %v1159
  %v1162 = vmul.f32 %v1147, %v1159
  %v1163 = vmul.f32 %v1148, %v1159
  %v1164 = vmul.f32 %v1149, %v1159
  %v1165 = vmul.f32 %v1150, %v1159
  %v1166 = vmul.f32 %v1151, %v1159
  %v1167 = vmul.f32 %v1152, %v1159
  %v1168 = vmul.f32 %v1153, %v1159
  %v1169 = vld [vmem:[%s5] sm:$0x1]
  %v1171 = vlaneseq
  %v1172 = vshrl.u32 %v1171, 7
  %v1173 = vsub.s32 0, %v1172
  %v1174 = vrot.slane %v1169, %v1173
  %v1176 = vadd.f32 %v1161, %v1174
  %v1177 = vadd.f32 %v1162, %v1174
  %v1178 = vadd.f32 %v1163, %v1174
  %v1179 = vadd.f32 %v1164, %v1174
  %v1180 = vadd.f32 %v1165, %v1174
  %v1181 = vadd.f32 %v1166, %v1174
  %v1182 = vadd.f32 %v1167, %v1174
  %v1183 = vadd.f32 %v1168, %v1174
  %v1184 = vld [vmem:[%s6] sm:$0xff]
  %v1185 = vld [vmem:[%s6 + $0x8] sm:$0xff]
  %v1186 = vld [vmem:[%s6 + $0x10] sm:$0xff]
  %v1187 = vld [vmem:[%s6 + $0x18] sm:$0xff]
  %v1188 = vld [vmem:[%s6 + $0x20] sm:$0xff]
  %v1189 = vld [vmem:[%s6 + $0x28] sm:$0xff]
  %v1190 = vld [vmem:[%s6 + $0x30] sm:$0xff]
  %v1191 = vld [vmem:[%s6 + $0x38] sm:$0xff]
  %v1192 = vld [vmem:[%s7] sm:$0xff]
  %v1193 = vld [vmem:[%s7 + $0x8] sm:$0xff]
  %v1194 = vld [vmem:[%s7 + $0x10] sm:$0xff]
  %v1195 = vld [vmem:[%s7 + $0x18] sm:$0xff]
  %v1196 = vld [vmem:[%s8] sm:$0x1]
  %v1198 = vlaneseq
  %v1199 = vshrl.u32 %v1198, 7
  %v1200 = vsub.s32 0, %v1199
  %v1201 = vrot.slane %v1196, %v1200
  %v1204 = vsel %vm230, %v1176, 0
  %v1207 = vsel %vm230, %v1177, 0
  %v1210 = vsel %vm230, %v1178, 0
  %v1213 = vsel %vm230, %v1179, 0
  %v1216 = vsel %vm230, %v1180, 0
  %v1219 = vsel %vm230, %v1181, 0
  %v1222 = vsel %vm230, %v1182, 0
  %v1225 = vsel %vm230, %v1183, 0
  %1227 = vmatprep.subr.mxu0 0.0
  %1228 = vmatpush1.msra.mxu0 0.0
  %1229 = vmatprep.subr.mxu0 0.0
  %1230 = vmatpush1.msra.mxu0 0.0
  %1231 = vmatprep.subr.mxu0 0.0
  %1232 = vmatpush1.msra.mxu0 0.0
  %1233 = vmatprep.subr.mxu0 0.0
  %1234 = vmatpush1.msra.mxu0 0.0
  %1235 = vmatprep.subr.mxu0 0.0
  %1236 = vmatpush1.msra.mxu0 0.0
  %1237 = vmatprep.subr.mxu0 0.0
  %1238 = vmatpush1.msra.mxu0 0.0
  %1239 = vmatprep.subr.mxu0 0.0
  %1240 = vmatpush1.msra.mxu0 0.0
  %1241 = vmatprep.subr.mxu0 0.0
  %1242 = vmatpush1.msra.mxu0 0.0
  %1243 = vmatprep.subr.mxu0 0.0
  %1244 = vmatpush1.msra.mxu0 %v1191
  %1245 = vmatprep.subr.mxu0 0.0
  %1246 = vmatpush1.msra.mxu0 %v1190
  %1247 = vmatprep.subr.mxu0 0.0
  %1248 = vmatpush1.msra.mxu0 %v1189
  %1249 = vmatprep.subr.mxu0 0.0
  %1250 = vmatpush1.msra.mxu0 %v1188
  %1251 = vmatprep.subr.mxu0 0.0
  %1252 = vmatpush1.msra.mxu0 %v1187
  %1253 = vmatprep.subr.mxu0 0.0
  %1254 = vmatpush1.msra.mxu0 %v1186
  %1255 = vmatprep.subr.mxu0 0.0
  %1256 = vmatpush1.msra.mxu0 %v1185
  %1257 = vmatprep.subr.mxu0 0.0
  %1258 = vmatpush1.msra.mxu0 %v1184
  %1259 = vmatprep.subr.mxu0 0.0
  %1260 = vmatpush2.msra.mxu0 0.0
  %1261 = vmatprep.subr.mxu0 0.0
  %1262 = vmatpush2.msra.mxu0 0.0
  %1263 = vmatprep.subr.mxu0 0.0
  %1264 = vmatpush2.msra.mxu0 0.0
  %1265 = vmatprep.subr.mxu0 0.0
  %1266 = vmatpush2.msra.mxu0 0.0
  %1267 = vmatprep.subr.mxu0 0.0
  %1268 = vmatpush2.msra.mxu0 0.0
  %1269 = vmatprep.subr.mxu0 0.0
  %1270 = vmatpush2.msra.mxu0 0.0
  %1271 = vmatprep.subr.mxu0 0.0
  %1272 = vmatpush2.msra.mxu0 0.0
  %1273 = vmatprep.subr.mxu0 0.0
  %1274 = vmatpush2.msra.mxu0 0.0
  %1275 = vmatprep.subr.mxu0 0.0
  %1276 = vmatpush2.msra.mxu0 0.0
  %1277 = vmatprep.subr.mxu0 0.0
  %1278 = vmatpush2.msra.mxu0 0.0
  %1279 = vmatprep.subr.mxu0 0.0
  %1280 = vmatpush2.msra.mxu0 0.0
  %1281 = vmatprep.subr.mxu0 0.0
  %1282 = vmatpush2.msra.mxu0 0.0
  %1283 = vmatprep.subr.mxu0 0.0
  %1284 = vmatpush2.msra.mxu0 0.0
  %1285 = vmatprep.subr.mxu0 0.0
  %1286 = vmatpush2.msra.mxu0 0.0
  %1287 = vmatprep.subr.mxu0 0.0
  %1288 = vmatpush2.msra.mxu0 0.0
  %1289 = vmatprep.subr.mxu0 0.0
  %1290 = vmatpush2.msra.mxu0 0.0
  %1291 = vmatprep.mubr.f32.mxu0 0.0
  %1292 = vmatmul.mubr.f32.gmra.mxu0 %v1204
  %v1293 = vpop.f32.mrf.mxu0
  %v1294 = vadd.f32 %v1201, %v1293
  %v1295 = vpop.f32.mrf.mxu0
  %1296 = vmatprep.mubr.f32.mxu0 0.0
  %1297 = vmatmul.mubr.f32.gmra.mxu0 %v1207
  %v1298 = vpop.f32.mrf.mxu0
  %v1299 = vadd.f32 %v1201, %v1298
  %v1300 = vpop.f32.mrf.mxu0
  %1301 = vmatprep.mubr.f32.mxu0 0.0
  %1302 = vmatmul.mubr.f32.gmra.mxu0 %v1210
  %v1303 = vpop.f32.mrf.mxu0
  %v1304 = vadd.f32 %v1201, %v1303
  %v1305 = vpop.f32.mrf.mxu0
  %1306 = vmatprep.mubr.f32.mxu0 0.0
  %1307 = vmatmul.mubr.f32.gmra.mxu0 %v1213
  %v1308 = vpop.f32.mrf.mxu0
  %v1309 = vadd.f32 %v1201, %v1308
  %v1310 = vpop.f32.mrf.mxu0
  %1311 = vmatprep.mubr.f32.mxu0 0.0
  %1312 = vmatmul.mubr.f32.gmra.mxu0 %v1216
  %v1313 = vpop.f32.mrf.mxu0
  %v1314 = vadd.f32 %v1201, %v1313
  %v1315 = vpop.f32.mrf.mxu0
  %1316 = vmatprep.mubr.f32.mxu0 0.0
  %1317 = vmatmul.mubr.f32.gmra.mxu0 %v1219
  %v1318 = vpop.f32.mrf.mxu0
  %v1319 = vadd.f32 %v1201, %v1318
  %v1320 = vpop.f32.mrf.mxu0
  %1321 = vmatprep.mubr.f32.mxu0 0.0
  %1322 = vmatmul.mubr.f32.gmra.mxu0 %v1222
  %v1323 = vpop.f32.mrf.mxu0
  %v1324 = vadd.f32 %v1201, %v1323
  %v1325 = vpop.f32.mrf.mxu0
  %1326 = vmatprep.mubr.f32.mxu0 0.0
  %1327 = vmatmul.mubr.f32.gmra.mxu0 %v1225
  %v1328 = vpop.f32.mrf.mxu0
  %v1329 = vadd.f32 %v1201, %v1328
  %v1330 = vpop.f32.mrf.mxu0
  %1331 = vdwg.mxu0
  %v1332 = vsel %vm1040, 0.0, 0
  %1334 = vmatprep.subr.mxu0 0.0
  %1335 = vmatpush1.msra.mxu0 0.0
  %1336 = vmatprep.subr.mxu0 0.0
  %1337 = vmatpush1.msra.mxu0 0.0
  %1338 = vmatprep.subr.mxu0 0.0
  %1339 = vmatpush1.msra.mxu0 0.0
  %1340 = vmatprep.subr.mxu0 0.0
  %1341 = vmatpush1.msra.mxu0 0.0
  %1342 = vmatprep.subr.mxu0 0.0
  %1343 = vmatpush1.msra.mxu0 0.0
  %1344 = vmatprep.subr.mxu0 0.0
  %1345 = vmatpush1.msra.mxu0 0.0
  %1346 = vmatprep.subr.mxu0 0.0
  %1347 = vmatpush1.msra.mxu0 0.0
  %1348 = vmatprep.subr.mxu0 0.0
  %1349 = vmatpush1.msra.mxu0 0.0
  %1350 = vmatprep.subr.mxu0 0.0
  %1351 = vmatpush1.msra.mxu0 0.0
  %1352 = vmatprep.subr.mxu0 0.0
  %1353 = vmatpush1.msra.mxu0 0.0
  %1354 = vmatprep.subr.mxu0 0.0
  %1355 = vmatpush1.msra.mxu0 0.0
  %1356 = vmatprep.subr.mxu0 0.0
  %1357 = vmatpush1.msra.mxu0 0.0
  %1358 = vmatprep.subr.mxu0 0.0
  %1359 = vmatpush1.msra.mxu0 %v1195
  %1360 = vmatprep.subr.mxu0 0.0
  %1361 = vmatpush1.msra.mxu0 %v1194
  %1362 = vmatprep.subr.mxu0 0.0
  %1363 = vmatpush1.msra.mxu0 %v1193
  %1364 = vmatprep.subr.mxu0 0.0
  %1365 = vmatpush1.msra.mxu0 %v1192
  %1366 = vmatprep.subr.mxu0 0.0
  %1367 = vmatpush2.msra.mxu0 0.0
  %1368 = vmatprep.subr.mxu0 0.0
  %1369 = vmatpush2.msra.mxu0 0.0
  %1370 = vmatprep.subr.mxu0 0.0
  %1371 = vmatpush2.msra.mxu0 0.0
  %1372 = vmatprep.subr.mxu0 0.0
  %1373 = vmatpush2.msra.mxu0 0.0
  %1374 = vmatprep.subr.mxu0 0.0
  %1375 = vmatpush2.msra.mxu0 0.0
  %1376 = vmatprep.subr.mxu0 0.0
  %1377 = vmatpush2.msra.mxu0 0.0
  %1378 = vmatprep.subr.mxu0 0.0
  %1379 = vmatpush2.msra.mxu0 0.0
  %1380 = vmatprep.subr.mxu0 0.0
  %1381 = vmatpush2.msra.mxu0 0.0
  %1382 = vmatprep.subr.mxu0 0.0
  %1383 = vmatpush2.msra.mxu0 0.0
  %1384 = vmatprep.subr.mxu0 0.0
  %1385 = vmatpush2.msra.mxu0 0.0
  %1386 = vmatprep.subr.mxu0 0.0
  %1387 = vmatpush2.msra.mxu0 0.0
  %1388 = vmatprep.subr.mxu0 0.0
  %1389 = vmatpush2.msra.mxu0 0.0
  %1390 = vmatprep.subr.mxu0 0.0
  %1391 = vmatpush2.msra.mxu0 0.0
  %1392 = vmatprep.subr.mxu0 0.0
  %1393 = vmatpush2.msra.mxu0 0.0
  %1394 = vmatprep.subr.mxu0 0.0
  %1395 = vmatpush2.msra.mxu0 0.0
  %1396 = vmatprep.subr.mxu0 0.0
  %1397 = vmatpush2.msra.mxu0 0.0
  %1398 = vmatprep.mubr.f32.mxu0 0.0
  %1399 = vmatmul.mubr.f32.gmra.mxu0 %v1332
  %v1400 = vpop.f32.mrf.mxu0
  %v1401 = vadd.f32 0.0, %v1400
  %v1402 = vpop.f32.mrf.mxu0
  %1403 = vdwg.mxu0
  %v1404 = vadd.f32 %v1294, %v1401
  %v1405 = vxor.u32 %v1404, 2147483648
  %v1406 = vmul.f32 %v1405, 1.442695
  %v1407 = vpow.pop %v1406
  %v1408 = vadd.f32 %v1407, 1.0
  %v1409 = vrcp.pop %v1408
  %v1410 = vmul.f32 1.0, %v1409
  %v1411 = vtanh.pop %v1404
  %v1412 = vmul.f32 %v1410, 0.0
  %1414 = vrot.lane.b32.xlu0 %v1411, 64
  %v1415 = vpop.permute.xlu0 %1414
  %v1417 = vmul.f32 %v1410, %v1415
  %1419 = vrot.lane.b32.xlu0 %v1417, 32
  %v1420 = vpop.permute.xlu0 %1419
  %v1422 = vadd.f32 %v1412, %v1420
  %v1423 = vtanh.pop %v1422
  %1425 = vrot.lane.b32.xlu0 %v1423, 64
  %v1426 = vpop.permute.xlu0 %1425
  %v1428 = vmul.f32 %v1410, %v1426
  %1430 = vrot.lane.b32.xlu0 %v1428, 32
  %v1431 = vpop.permute.xlu0 %1430
  %v1432 = vsel %vm1040, %v1431, 0
  %1434 = vmatprep.subr.mxu0 0.0
  %1435 = vmatpush1.msra.mxu0 0.0
  %1436 = vmatprep.subr.mxu0 0.0
  %1437 = vmatpush1.msra.mxu0 0.0
  %1438 = vmatprep.subr.mxu0 0.0
  %1439 = vmatpush1.msra.mxu0 0.0
  %1440 = vmatprep.subr.mxu0 0.0
  %1441 = vmatpush1.msra.mxu0 0.0
  %1442 = vmatprep.subr.mxu0 0.0
  %1443 = vmatpush1.msra.mxu0 0.0
  %1444 = vmatprep.subr.mxu0 0.0
  %1445 = vmatpush1.msra.mxu0 0.0
  %1446 = vmatprep.subr.mxu0 0.0
  %1447 = vmatpush1.msra.mxu0 0.0
  %1448 = vmatprep.subr.mxu0 0.0
  %1449 = vmatpush1.msra.mxu0 0.0
  %1450 = vmatprep.subr.mxu0 0.0
  %1451 = vmatpush1.msra.mxu0 0.0
  %1452 = vmatprep.subr.mxu0 0.0
  %1453 = vmatpush1.msra.mxu0 0.0
  %1454 = vmatprep.subr.mxu0 0.0
  %1455 = vmatpush1.msra.mxu0 0.0
  %1456 = vmatprep.subr.mxu0 0.0
  %1457 = vmatpush1.msra.mxu0 0.0
  %1458 = vmatprep.subr.mxu0 0.0
  %1459 = vmatpush1.msra.mxu0 %v1195
  %1460 = vmatprep.subr.mxu0 0.0
  %1461 = vmatpush1.msra.mxu0 %v1194
  %1462 = vmatprep.subr.mxu0 0.0
  %1463 = vmatpush1.msra.mxu0 %v1193
  %1464 = vmatprep.subr.mxu0 0.0
  %1465 = vmatpush1.msra.mxu0 %v1192
  %1466 = vmatprep.subr.mxu0 0.0
  %1467 = vmatpush2.msra.mxu0 0.0
  %1468 = vmatprep.subr.mxu0 0.0
  %1469 = vmatpush2.msra.mxu0 0.0
  %1470 = vmatprep.subr.mxu0 0.0
  %1471 = vmatpush2.msra.mxu0 0.0
  %1472 = vmatprep.subr.mxu0 0.0
  %1473 = vmatpush2.msra.mxu0 0.0
  %1474 = vmatprep.subr.mxu0 0.0
  %1475 = vmatpush2.msra.mxu0 0.0
  %1476 = vmatprep.subr.mxu0 0.0
  %1477 = vmatpush2.msra.mxu0 0.0
  %1478 = vmatprep.subr.mxu0 0.0
  %1479 = vmatpush2.msra.mxu0 0.0
  %1480 = vmatprep.subr.mxu0 0.0
  %1481 = vmatpush2.msra.mxu0 0.0
  %1482 = vmatprep.subr.mxu0 0.0
  %1483 = vmatpush2.msra.mxu0 0.0
  %1484 = vmatprep.subr.mxu0 0.0
  %1485 = vmatpush2.msra.mxu0 0.0
  %1486 = vmatprep.subr.mxu0 0.0
  %1487 = vmatpush2.msra.mxu0 0.0
  %1488 = vmatprep.subr.mxu0 0.0
  %1489 = vmatpush2.msra.mxu0 0.0
  %1490 = vmatprep.subr.mxu0 0.0
  %1491 = vmatpush2.msra.mxu0 0.0
  %1492 = vmatprep.subr.mxu0 0.0
  %1493 = vmatpush2.msra.mxu0 0.0
  %1494 = vmatprep.subr.mxu0 0.0
  %1495 = vmatpush2.msra.mxu0 0.0
  %1496 = vmatprep.subr.mxu0 0.0
  %1497 = vmatpush2.msra.mxu0 0.0
  %1498 = vmatprep.mubr.f32.mxu0 0.0
  %1499 = vmatmul.mubr.f32.gmra.mxu0 %v1432
  %v1500 = vpop.f32.mrf.mxu0
  %v1501 = vadd.f32 0.0, %v1500
  %v1502 = vpop.f32.mrf.mxu0
  %1503 = vdwg.mxu0
  %v1504 = vadd.f32 %v1299, %v1501
  %v1505 = vxor.u32 %v1504, 2147483648
  %v1506 = vmul.f32 %v1505, 1.442695
  %v1507 = vpow.pop %v1506
  %v1508 = vadd.f32 %v1507, 1.0
  %v1509 = vrcp.pop %v1508
  %v1510 = vmul.f32 1.0, %v1509
  %v1511 = vtanh.pop %v1504
  %v1512 = vmul.f32 %v1510, %v1422
  %1514 = vrot.lane.b32.xlu0 %v1511, 64
  %v1515 = vpop.permute.xlu0 %1514
  %v1517 = vmul.f32 %v1510, %v1515
  %1519 = vrot.lane.b32.xlu0 %v1517, 32
  %v1520 = vpop.permute.xlu0 %1519
  %v1522 = vadd.f32 %v1512, %v1520
  %v1523 = vtanh.pop %v1522
  %1525 = vrot.lane.b32.xlu0 %v1523, 64
  %v1526 = vpop.permute.xlu0 %1525
  %v1528 = vmul.f32 %v1510, %v1526
  %1530 = vrot.lane.b32.xlu0 %v1528, 32
  %v1531 = vpop.permute.xlu0 %1530
  %v1532 = vsel %vm1040, %v1531, 0
  %1534 = vmatprep.subr.mxu0 0.0
  %1535 = vmatpush1.msra.mxu0 0.0
  %1536 = vmatprep.subr.mxu0 0.0
  %1537 = vmatpush1.msra.mxu0 0.0
  %1538 = vmatprep.subr.mxu0 0.0
  %1539 = vmatpush1.msra.mxu0 0.0
  %1540 = vmatprep.subr.mxu0 0.0
  %1541 = vmatpush1.msra.mxu0 0.0
  %1542 = vmatprep.subr.mxu0 0.0
  %1543 = vmatpush1.msra.mxu0 0.0
  %1544 = vmatprep.subr.mxu0 0.0
  %1545 = vmatpush1.msra.mxu0 0.0
  %1546 = vmatprep.subr.mxu0 0.0
  %1547 = vmatpush1.msra.mxu0 0.0
  %1548 = vmatprep.subr.mxu0 0.0
  %1549 = vmatpush1.msra.mxu0 0.0
  %1550 = vmatprep.subr.mxu0 0.0
  %1551 = vmatpush1.msra.mxu0 0.0
  %1552 = vmatprep.subr.mxu0 0.0
  %1553 = vmatpush1.msra.mxu0 0.0
  %1554 = vmatprep.subr.mxu0 0.0
  %1555 = vmatpush1.msra.mxu0 0.0
  %1556 = vmatprep.subr.mxu0 0.0
  %1557 = vmatpush1.msra.mxu0 0.0
  %1558 = vmatprep.subr.mxu0 0.0
  %1559 = vmatpush1.msra.mxu0 %v1195
  %1560 = vmatprep.subr.mxu0 0.0
  %1561 = vmatpush1.msra.mxu0 %v1194
  %1562 = vmatprep.subr.mxu0 0.0
  %1563 = vmatpush1.msra.mxu0 %v1193
  %1564 = vmatprep.subr.mxu0 0.0
  %1565 = vmatpush1.msra.mxu0 %v1192
  %1566 = vmatprep.subr.mxu0 0.0
  %1567 = vmatpush2.msra.mxu0 0.0
  %1568 = vmatprep.subr.mxu0 0.0
  %1569 = vmatpush2.msra.mxu0 0.0
  %1570 = vmatprep.subr.mxu0 0.0
  %1571 = vmatpush2.msra.mxu0 0.0
  %1572 = vmatprep.subr.mxu0 0.0
  %1573 = vmatpush2.msra.mxu0 0.0
  %1574 = vmatprep.subr.mxu0 0.0
  %1575 = vmatpush2.msra.mxu0 0.0
  %1576 = vmatprep.subr.mxu0 0.0
  %1577 = vmatpush2.msra.mxu0 0.0
  %1578 = vmatprep.subr.mxu0 0.0
  %1579 = vmatpush2.msra.mxu0 0.0
  %1580 = vmatprep.subr.mxu0 0.0
  %1581 = vmatpush2.msra.mxu0 0.0
  %1582 = vmatprep.subr.mxu0 0.0
  %1583 = vmatpush2.msra.mxu0 0.0
  %1584 = vmatprep.subr.mxu0 0.0
  %1585 = vmatpush2.msra.mxu0 0.0
  %1586 = vmatprep.subr.mxu0 0.0
  %1587 = vmatpush2.msra.mxu0 0.0
  %1588 = vmatprep.subr.mxu0 0.0
  %1589 = vmatpush2.msra.mxu0 0.0
  %1590 = vmatprep.subr.mxu0 0.0
  %1591 = vmatpush2.msra.mxu0 0.0
  %1592 = vmatprep.subr.mxu0 0.0
  %1593 = vmatpush2.msra.mxu0 0.0
  %1594 = vmatprep.subr.mxu0 0.0
  %1595 = vmatpush2.msra.mxu0 0.0
  %1596 = vmatprep.subr.mxu0 0.0
  %1597 = vmatpush2.msra.mxu0 0.0
  %1598 = vmatprep.mubr.f32.mxu0 0.0
  %1599 = vmatmul.mubr.f32.gmra.mxu0 %v1532
  %v1600 = vpop.f32.mrf.mxu0
  %v1601 = vadd.f32 0.0, %v1600
  %v1602 = vpop.f32.mrf.mxu0
  %1603 = vdwg.mxu0
  %v1604 = vadd.f32 %v1304, %v1601
  %v1605 = vxor.u32 %v1604, 2147483648
  %v1606 = vmul.f32 %v1605, 1.442695
  %v1607 = vpow.pop %v1606
  %v1608 = vadd.f32 %v1607, 1.0
  %v1609 = vrcp.pop %v1608
  %v1610 = vmul.f32 1.0, %v1609
  %v1611 = vtanh.pop %v1604
  %v1612 = vmul.f32 %v1610, %v1522
  %1614 = vrot.lane.b32.xlu0 %v1611, 64
  %v1615 = vpop.permute.xlu0 %1614
  %v1617 = vmul.f32 %v1610, %v1615
  %1619 = vrot.lane.b32.xlu0 %v1617, 32
  %v1620 = vpop.permute.xlu0 %1619
  %v1622 = vadd.f32 %v1612, %v1620
  %v1623 = vtanh.pop %v1622
  %1625 = vrot.lane.b32.xlu0 %v1623, 64
  %v1626 = vpop.permute.xlu0 %1625
  %v1628 = vmul.f32 %v1610, %v1626
  %1630 = vrot.lane.b32.xlu0 %v1628, 32
  %v1631 = vpop.permute.xlu0 %1630
  %v1632 = vsel %vm1040, %v1631, 0
  %1634 = vmatprep.subr.mxu0 0.0
  %1635 = vmatpush1.msra.mxu0 0.0
  %1636 = vmatprep.subr.mxu0 0.0
  %1637 = vmatpush1.msra.mxu0 0.0
  %1638 = vmatprep.subr.mxu0 0.0
  %1639 = vmatpush1.msra.mxu0 0.0
  %1640 = vmatprep.subr.mxu0 0.0
  %1641 = vmatpush1.msra.mxu0 0.0
  %1642 = vmatprep.subr.mxu0 0.0
  %1643 = vmatpush1.msra.mxu0 0.0
  %1644 = vmatprep.subr.mxu0 0.0
  %1645 = vmatpush1.msra.mxu0 0.0
  %1646 = vmatprep.subr.mxu0 0.0
  %1647 = vmatpush1.msra.mxu0 0.0
  %1648 = vmatprep.subr.mxu0 0.0
  %1649 = vmatpush1.msra.mxu0 0.0
  %1650 = vmatprep.subr.mxu0 0.0
  %1651 = vmatpush1.msra.mxu0 0.0
  %1652 = vmatprep.subr.mxu0 0.0
  %1653 = vmatpush1.msra.mxu0 0.0
  %1654 = vmatprep.subr.mxu0 0.0
  %1655 = vmatpush1.msra.mxu0 0.0
  %1656 = vmatprep.subr.mxu0 0.0
  %1657 = vmatpush1.msra.mxu0 0.0
  %1658 = vmatprep.subr.mxu0 0.0
  %1659 = vmatpush1.msra.mxu0 %v1195
  %1660 = vmatprep.subr.mxu0 0.0
  %1661 = vmatpush1.msra.mxu0 %v1194
  %1662 = vmatprep.subr.mxu0 0.0
  %1663 = vmatpush1.msra.mxu0 %v1193
  %1664 = vmatprep.subr.mxu0 0.0
  %1665 = vmatpush1.msra.mxu0 %v1192
  %1666 = vmatprep.subr.mxu0 0.0
  %1667 = vmatpush2.msra.mxu0 0.0
  %1668 = vmatprep.subr.mxu0 0.0
  %1669 = vmatpush2.msra.mxu0 0.0
  %1670 = vmatprep.subr.mxu0 0.0
  %1671 = vmatpush2.msra.mxu0 0.0
  %1672 = vmatprep.subr.mxu0 0.0
  %1673 = vmatpush2.msra.mxu0 0.0
  %1674 = vmatprep.subr.mxu0 0.0
  %1675 = vmatpush2.msra.mxu0 0.0
  %1676 = vmatprep.subr.mxu0 0.0
  %1677 = vmatpush2.msra.mxu0 0.0
  %1678 = vmatprep.subr.mxu0 0.0
  %1679 = vmatpush2.msra.mxu0 0.0
  %1680 = vmatprep.subr.mxu0 0.0
  %1681 = vmatpush2.msra.mxu0 0.0
  %1682 = vmatprep.subr.mxu0 0.0
  %1683 = vmatpush2.msra.mxu0 0.0
  %1684 = vmatprep.subr.mxu0 0.0
  %1685 = vmatpush2.msra.mxu0 0.0
  %1686 = vmatprep.subr.mxu0 0.0
  %1687 = vmatpush2.msra.mxu0 0.0
  %1688 = vmatprep.subr.mxu0 0.0
  %1689 = vmatpush2.msra.mxu0 0.0
  %1690 = vmatprep.subr.mxu0 0.0
  %1691 = vmatpush2.msra.mxu0 0.0
  %1692 = vmatprep.subr.mxu0 0.0
  %1693 = vmatpush2.msra.mxu0 0.0
  %1694 = vmatprep.subr.mxu0 0.0
  %1695 = vmatpush2.msra.mxu0 0.0
  %1696 = vmatprep.subr.mxu0 0.0
  %1697 = vmatpush2.msra.mxu0 0.0
  %1698 = vmatprep.mubr.f32.mxu0 0.0
  %1699 = vmatmul.mubr.f32.gmra.mxu0 %v1632
  %v1700 = vpop.f32.mrf.mxu0
  %v1701 = vadd.f32 0.0, %v1700
  %v1702 = vpop.f32.mrf.mxu0
  %1703 = vdwg.mxu0
  %v1704 = vadd.f32 %v1309, %v1701
  %v1705 = vxor.u32 %v1704, 2147483648
  %v1706 = vmul.f32 %v1705, 1.442695
  %v1707 = vpow.pop %v1706
  %v1708 = vadd.f32 %v1707, 1.0
  %v1709 = vrcp.pop %v1708
  %v1710 = vmul.f32 1.0, %v1709
  %v1711 = vtanh.pop %v1704
  %v1712 = vmul.f32 %v1710, %v1622
  %1714 = vrot.lane.b32.xlu0 %v1711, 64
  %v1715 = vpop.permute.xlu0 %1714
  %v1717 = vmul.f32 %v1710, %v1715
  %1719 = vrot.lane.b32.xlu0 %v1717, 32
  %v1720 = vpop.permute.xlu0 %1719
  %v1722 = vadd.f32 %v1712, %v1720
  %v1723 = vtanh.pop %v1722
  %1725 = vrot.lane.b32.xlu0 %v1723, 64
  %v1726 = vpop.permute.xlu0 %1725
  %v1728 = vmul.f32 %v1710, %v1726
  %1730 = vrot.lane.b32.xlu0 %v1728, 32
  %v1731 = vpop.permute.xlu0 %1730
  %v1732 = vsel %vm1040, %v1731, 0
  %1734 = vmatprep.subr.mxu0 0.0
  %1735 = vmatpush1.msra.mxu0 0.0
  %1736 = vmatprep.subr.mxu0 0.0
  %1737 = vmatpush1.msra.mxu0 0.0
  %1738 = vmatprep.subr.mxu0 0.0
  %1739 = vmatpush1.msra.mxu0 0.0
  %1740 = vmatprep.subr.mxu0 0.0
  %1741 = vmatpush1.msra.mxu0 0.0
  %1742 = vmatprep.subr.mxu0 0.0
  %1743 = vmatpush1.msra.mxu0 0.0
  %1744 = vmatprep.subr.mxu0 0.0
  %1745 = vmatpush1.msra.mxu0 0.0
  %1746 = vmatprep.subr.mxu0 0.0
  %1747 = vmatpush1.msra.mxu0 0.0
  %1748 = vmatprep.subr.mxu0 0.0
  %1749 = vmatpush1.msra.mxu0 0.0
  %1750 = vmatprep.subr.mxu0 0.0
  %1751 = vmatpush1.msra.mxu0 0.0
  %1752 = vmatprep.subr.mxu0 0.0
  %1753 = vmatpush1.msra.mxu0 0.0
  %1754 = vmatprep.subr.mxu0 0.0
  %1755 = vmatpush1.msra.mxu0 0.0
  %1756 = vmatprep.subr.mxu0 0.0
  %1757 = vmatpush1.msra.mxu0 0.0
  %1758 = vmatprep.subr.mxu0 0.0
  %1759 = vmatpush1.msra.mxu0 %v1195
  %1760 = vmatprep.subr.mxu0 0.0
  %1761 = vmatpush1.msra.mxu0 %v1194
  %1762 = vmatprep.subr.mxu0 0.0
  %1763 = vmatpush1.msra.mxu0 %v1193
  %1764 = vmatprep.subr.mxu0 0.0
  %1765 = vmatpush1.msra.mxu0 %v1192
  %1766 = vmatprep.subr.mxu0 0.0
  %1767 = vmatpush2.msra.mxu0 0.0
  %1768 = vmatprep.subr.mxu0 0.0
  %1769 = vmatpush2.msra.mxu0 0.0
  %1770 = vmatprep.subr.mxu0 0.0
  %1771 = vmatpush2.msra.mxu0 0.0
  %1772 = vmatprep.subr.mxu0 0.0
  %1773 = vmatpush2.msra.mxu0 0.0
  %1774 = vmatprep.subr.mxu0 0.0
  %1775 = vmatpush2.msra.mxu0 0.0
  %1776 = vmatprep.subr.mxu0 0.0
  %1777 = vmatpush2.msra.mxu0 0.0
  %1778 = vmatprep.subr.mxu0 0.0
  %1779 = vmatpush2.msra.mxu0 0.0
  %1780 = vmatprep.subr.mxu0 0.0
  %1781 = vmatpush2.msra.mxu0 0.0
  %1782 = vmatprep.subr.mxu0 0.0
  %1783 = vmatpush2.msra.mxu0 0.0
  %1784 = vmatprep.subr.mxu0 0.0
  %1785 = vmatpush2.msra.mxu0 0.0
  %1786 = vmatprep.subr.mxu0 0.0
  %1787 = vmatpush2.msra.mxu0 0.0
  %1788 = vmatprep.subr.mxu0 0.0
  %1789 = vmatpush2.msra.mxu0 0.0
  %1790 = vmatprep.subr.mxu0 0.0
  %1791 = vmatpush2.msra.mxu0 0.0
  %1792 = vmatprep.subr.mxu0 0.0
  %1793 = vmatpush2.msra.mxu0 0.0
  %1794 = vmatprep.subr.mxu0 0.0
  %1795 = vmatpush2.msra.mxu0 0.0
  %1796 = vmatprep.subr.mxu0 0.0
  %1797 = vmatpush2.msra.mxu0 0.0
  %1798 = vmatprep.mubr.f32.mxu0 0.0
  %1799 = vmatmul.mubr.f32.gmra.mxu0 %v1732
  %v1800 = vpop.f32.mrf.mxu0
  %v1801 = vadd.f32 0.0, %v1800
  %v1802 = vpop.f32.mrf.mxu0
  %1803 = vdwg.mxu0
  %v1804 = vadd.f32 %v1314, %v1801
  %v1805 = vxor.u32 %v1804, 2147483648
  %v1806 = vmul.f32 %v1805, 1.442695
  %v1807 = vpow.pop %v1806
  %v1808 = vadd.f32 %v1807, 1.0
  %v1809 = vrcp.pop %v1808
  %v1810 = vmul.f32 1.0, %v1809
  %v1811 = vtanh.pop %v1804
  %v1812 = vmul.f32 %v1810, %v1722
  %1814 = vrot.lane.b32.xlu0 %v1811, 64
  %v1815 = vpop.permute.xlu0 %1814
  %v1817 = vmul.f32 %v1810, %v1815
  %1819 = vrot.lane.b32.xlu0 %v1817, 32
  %v1820 = vpop.permute.xlu0 %1819
  %v1822 = vadd.f32 %v1812, %v1820
  %v1823 = vtanh.pop %v1822
  %1825 = vrot.lane.b32.xlu0 %v1823, 64
  %v1826 = vpop.permute.xlu0 %1825
  %v1828 = vmul.f32 %v1810, %v1826
  %1830 = vrot.lane.b32.xlu0 %v1828, 32
  %v1831 = vpop.permute.xlu0 %1830
  %v1832 = vsel %vm1040, %v1831, 0
  %1834 = vmatprep.subr.mxu0 0.0
  %1835 = vmatpush1.msra.mxu0 0.0
  %1836 = vmatprep.subr.mxu0 0.0
  %1837 = vmatpush1.msra.mxu0 0.0
  %1838 = vmatprep.subr.mxu0 0.0
  %1839 = vmatpush1.msra.mxu0 0.0
  %1840 = vmatprep.subr.mxu0 0.0
  %1841 = vmatpush1.msra.mxu0 0.0
  %1842 = vmatprep.subr.mxu0 0.0
  %1843 = vmatpush1.msra.mxu0 0.0
  %1844 = vmatprep.subr.mxu0 0.0
  %1845 = vmatpush1.msra.mxu0 0.0
  %1846 = vmatprep.subr.mxu0 0.0
  %1847 = vmatpush1.msra.mxu0 0.0
  %1848 = vmatprep.subr.mxu0 0.0
  %1849 = vmatpush1.msra.mxu0 0.0
  %1850 = vmatprep.subr.mxu0 0.0
  %1851 = vmatpush1.msra.mxu0 0.0
  %1852 = vmatprep.subr.mxu0 0.0
  %1853 = vmatpush1.msra.mxu0 0.0
  %1854 = vmatprep.subr.mxu0 0.0
  %1855 = vmatpush1.msra.mxu0 0.0
  %1856 = vmatprep.subr.mxu0 0.0
  %1857 = vmatpush1.msra.mxu0 0.0
  %1858 = vmatprep.subr.mxu0 0.0
  %1859 = vmatpush1.msra.mxu0 %v1195
  %1860 = vmatprep.subr.mxu0 0.0
  %1861 = vmatpush1.msra.mxu0 %v1194
  %1862 = vmatprep.subr.mxu0 0.0
  %1863 = vmatpush1.msra.mxu0 %v1193
  %1864 = vmatprep.subr.mxu0 0.0
  %1865 = vmatpush1.msra.mxu0 %v1192
  %1866 = vmatprep.subr.mxu0 0.0
  %1867 = vmatpush2.msra.mxu0 0.0
  %1868 = vmatprep.subr.mxu0 0.0
  %1869 = vmatpush2.msra.mxu0 0.0
  %1870 = vmatprep.subr.mxu0 0.0
  %1871 = vmatpush2.msra.mxu0 0.0
  %1872 = vmatprep.subr.mxu0 0.0
  %1873 = vmatpush2.msra.mxu0 0.0
  %1874 = vmatprep.subr.mxu0 0.0
  %1875 = vmatpush2.msra.mxu0 0.0
  %1876 = vmatprep.subr.mxu0 0.0
  %1877 = vmatpush2.msra.mxu0 0.0
  %1878 = vmatprep.subr.mxu0 0.0
  %1879 = vmatpush2.msra.mxu0 0.0
  %1880 = vmatprep.subr.mxu0 0.0
  %1881 = vmatpush2.msra.mxu0 0.0
  %1882 = vmatprep.subr.mxu0 0.0
  %1883 = vmatpush2.msra.mxu0 0.0
  %1884 = vmatprep.subr.mxu0 0.0
  %1885 = vmatpush2.msra.mxu0 0.0
  %1886 = vmatprep.subr.mxu0 0.0
  %1887 = vmatpush2.msra.mxu0 0.0
  %1888 = vmatprep.subr.mxu0 0.0
  %1889 = vmatpush2.msra.mxu0 0.0
  %1890 = vmatprep.subr.mxu0 0.0
  %1891 = vmatpush2.msra.mxu0 0.0
  %1892 = vmatprep.subr.mxu0 0.0
  %1893 = vmatpush2.msra.mxu0 0.0
  %1894 = vmatprep.subr.mxu0 0.0
  %1895 = vmatpush2.msra.mxu0 0.0
  %1896 = vmatprep.subr.mxu0 0.0
  %1897 = vmatpush2.msra.mxu0 0.0
  %1898 = vmatprep.mubr.f32.mxu0 0.0
  %1899 = vmatmul.mubr.f32.gmra.mxu0 %v1832
  %v1900 = vpop.f32.mrf.mxu0
  %v1901 = vadd.f32 0.0, %v1900
  %v1902 = vpop.f32.mrf.mxu0
  %1903 = vdwg.mxu0
  %v1904 = vadd.f32 %v1319, %v1901
  %v1905 = vxor.u32 %v1904, 2147483648
  %v1906 = vmul.f32 %v1905, 1.442695
  %v1907 = vpow.pop %v1906
  %v1908 = vadd.f32 %v1907, 1.0
  %v1909 = vrcp.pop %v1908
  %v1910 = vmul.f32 1.0, %v1909
  %v1911 = vtanh.pop %v1904
  %v1912 = vmul.f32 %v1910, %v1822
  %1914 = vrot.lane.b32.xlu0 %v1911, 64
  %v1915 = vpop.permute.xlu0 %1914
  %v1917 = vmul.f32 %v1910, %v1915
  %1919 = vrot.lane.b32.xlu0 %v1917, 32
  %v1920 = vpop.permute.xlu0 %1919
  %v1922 = vadd.f32 %v1912, %v1920
  %v1923 = vtanh.pop %v1922
  %1925 = vrot.lane.b32.xlu0 %v1923, 64
  %v1926 = vpop.permute.xlu0 %1925
  %v1928 = vmul.f32 %v1910, %v1926
  %1930 = vrot.lane.b32.xlu0 %v1928, 32
  %v1931 = vpop.permute.xlu0 %1930
  %v1932 = vsel %vm1040, %v1931, 0
  %1934 = vmatprep.subr.mxu0 0.0
  %1935 = vmatpush1.msra.mxu0 0.0
  %1936 = vmatprep.subr.mxu0 0.0
  %1937 = vmatpush1.msra.mxu0 0.0
  %1938 = vmatprep.subr.mxu0 0.0
  %1939 = vmatpush1.msra.mxu0 0.0
  %1940 = vmatprep.subr.mxu0 0.0
  %1941 = vmatpush1.msra.mxu0 0.0
  %1942 = vmatprep.subr.mxu0 0.0
  %1943 = vmatpush1.msra.mxu0 0.0
  %1944 = vmatprep.subr.mxu0 0.0
  %1945 = vmatpush1.msra.mxu0 0.0
  %1946 = vmatprep.subr.mxu0 0.0
  %1947 = vmatpush1.msra.mxu0 0.0
  %1948 = vmatprep.subr.mxu0 0.0
  %1949 = vmatpush1.msra.mxu0 0.0
  %1950 = vmatprep.subr.mxu0 0.0
  %1951 = vmatpush1.msra.mxu0 0.0
  %1952 = vmatprep.subr.mxu0 0.0
  %1953 = vmatpush1.msra.mxu0 0.0
  %1954 = vmatprep.subr.mxu0 0.0
  %1955 = vmatpush1.msra.mxu0 0.0
  %1956 = vmatprep.subr.mxu0 0.0
  %1957 = vmatpush1.msra.mxu0 0.0
  %1958 = vmatprep.subr.mxu0 0.0
  %1959 = vmatpush1.msra.mxu0 %v1195
  %1960 = vmatprep.subr.mxu0 0.0
  %1961 = vmatpush1.msra.mxu0 %v1194
  %1962 = vmatprep.subr.mxu0 0.0
  %1963 = vmatpush1.msra.mxu0 %v1193
  %1964 = vmatprep.subr.mxu0 0.0
  %1965 = vmatpush1.msra.mxu0 %v1192
  %1966 = vmatprep.subr.mxu0 0.0
  %1967 = vmatpush2.msra.mxu0 0.0
  %1968 = vmatprep.subr.mxu0 0.0
  %1969 = vmatpush2.msra.mxu0 0.0
  %1970 = vmatprep.subr.mxu0 0.0
  %1971 = vmatpush2.msra.mxu0 0.0
  %1972 = vmatprep.subr.mxu0 0.0
  %1973 = vmatpush2.msra.mxu0 0.0
  %1974 = vmatprep.subr.mxu0 0.0
  %1975 = vmatpush2.msra.mxu0 0.0
  %1976 = vmatprep.subr.mxu0 0.0
  %1977 = vmatpush2.msra.mxu0 0.0
  %1978 = vmatprep.subr.mxu0 0.0
  %1979 = vmatpush2.msra.mxu0 0.0
  %1980 = vmatprep.subr.mxu0 0.0
  %1981 = vmatpush2.msra.mxu0 0.0
  %1982 = vmatprep.subr.mxu0 0.0
  %1983 = vmatpush2.msra.mxu0 0.0
  %1984 = vmatprep.subr.mxu0 0.0
  %1985 = vmatpush2.msra.mxu0 0.0
  %1986 = vmatprep.subr.mxu0 0.0
  %1987 = vmatpush2.msra.mxu0 0.0
  %1988 = vmatprep.subr.mxu0 0.0
  %1989 = vmatpush2.msra.mxu0 0.0
  %1990 = vmatprep.subr.mxu0 0.0
  %1991 = vmatpush2.msra.mxu0 0.0
  %1992 = vmatprep.subr.mxu0 0.0
  %1993 = vmatpush2.msra.mxu0 0.0
  %1994 = vmatprep.subr.mxu0 0.0
  %1995 = vmatpush2.msra.mxu0 0.0
  %1996 = vmatprep.subr.mxu0 0.0
  %1997 = vmatpush2.msra.mxu0 0.0
  %1998 = vmatprep.mubr.f32.mxu0 0.0
  %1999 = vmatmul.mubr.f32.gmra.mxu0 %v1932
  %v2000 = vpop.f32.mrf.mxu0
  %v2001 = vadd.f32 0.0, %v2000
  %v2002 = vpop.f32.mrf.mxu0
  %2003 = vdwg.mxu0
  %v2004 = vadd.f32 %v1324, %v2001
  %v2005 = vxor.u32 %v2004, 2147483648
  %v2006 = vmul.f32 %v2005, 1.442695
  %v2007 = vpow.pop %v2006
  %v2008 = vadd.f32 %v2007, 1.0
  %v2009 = vrcp.pop %v2008
  %v2010 = vmul.f32 1.0, %v2009
  %v2011 = vtanh.pop %v2004
  %v2012 = vmul.f32 %v2010, %v1922
  %2014 = vrot.lane.b32.xlu0 %v2011, 64
  %v2015 = vpop.permute.xlu0 %2014
  %v2017 = vmul.f32 %v2010, %v2015
  %2019 = vrot.lane.b32.xlu0 %v2017, 32
  %v2020 = vpop.permute.xlu0 %2019
  %v2022 = vadd.f32 %v2012, %v2020
  %v2023 = vtanh.pop %v2022
  %2025 = vrot.lane.b32.xlu0 %v2023, 64
  %v2026 = vpop.permute.xlu0 %2025
  %v2028 = vmul.f32 %v2010, %v2026
  %2030 = vrot.lane.b32.xlu0 %v2028, 32
  %v2031 = vpop.permute.xlu0 %2030
  %v2032 = vsel %vm1040, %v2031, 0
  %2034 = vmatprep.subr.mxu0 0.0
  %2035 = vmatpush1.msra.mxu0 0.0
  %2036 = vmatprep.subr.mxu0 0.0
  %2037 = vmatpush1.msra.mxu0 0.0
  %2038 = vmatprep.subr.mxu0 0.0
  %2039 = vmatpush1.msra.mxu0 0.0
  %2040 = vmatprep.subr.mxu0 0.0
  %2041 = vmatpush1.msra.mxu0 0.0
  %2042 = vmatprep.subr.mxu0 0.0
  %2043 = vmatpush1.msra.mxu0 0.0
  %2044 = vmatprep.subr.mxu0 0.0
  %2045 = vmatpush1.msra.mxu0 0.0
  %2046 = vmatprep.subr.mxu0 0.0
  %2047 = vmatpush1.msra.mxu0 0.0
  %2048 = vmatprep.subr.mxu0 0.0
  %2049 = vmatpush1.msra.mxu0 0.0
  %2050 = vmatprep.subr.mxu0 0.0
  %2051 = vmatpush1.msra.mxu0 0.0
  %2052 = vmatprep.subr.mxu0 0.0
  %2053 = vmatpush1.msra.mxu0 0.0
  %2054 = vmatprep.subr.mxu0 0.0
  %2055 = vmatpush1.msra.mxu0 0.0
  %2056 = vmatprep.subr.mxu0 0.0
  %2057 = vmatpush1.msra.mxu0 0.0
  %2058 = vmatprep.subr.mxu0 0.0
  %2059 = vmatpush1.msra.mxu0 %v1195
  %2060 = vmatprep.subr.mxu0 0.0
  %2061 = vmatpush1.msra.mxu0 %v1194
  %2062 = vmatprep.subr.mxu0 0.0
  %2063 = vmatpush1.msra.mxu0 %v1193
  %2064 = vmatprep.subr.mxu0 0.0
  %2065 = vmatpush1.msra.mxu0 %v1192
  %2066 = vmatprep.subr.mxu0 0.0
  %2067 = vmatpush2.msra.mxu0 0.0
  %2068 = vmatprep.subr.mxu0 0.0
  %2069 = vmatpush2.msra.mxu0 0.0
  %2070 = vmatprep.subr.mxu0 0.0
  %2071 = vmatpush2.msra.mxu0 0.0
  %2072 = vmatprep.subr.mxu0 0.0
  %2073 = vmatpush2.msra.mxu0 0.0
  %2074 = vmatprep.subr.mxu0 0.0
  %2075 = vmatpush2.msra.mxu0 0.0
  %2076 = vmatprep.subr.mxu0 0.0
  %2077 = vmatpush2.msra.mxu0 0.0
  %2078 = vmatprep.subr.mxu0 0.0
  %2079 = vmatpush2.msra.mxu0 0.0
  %2080 = vmatprep.subr.mxu0 0.0
  %2081 = vmatpush2.msra.mxu0 0.0
  %2082 = vmatprep.subr.mxu0 0.0
  %2083 = vmatpush2.msra.mxu0 0.0
  %2084 = vmatprep.subr.mxu0 0.0
  %2085 = vmatpush2.msra.mxu0 0.0
  %2086 = vmatprep.subr.mxu0 0.0
  %2087 = vmatpush2.msra.mxu0 0.0
  %2088 = vmatprep.subr.mxu0 0.0
  %2089 = vmatpush2.msra.mxu0 0.0
  %2090 = vmatprep.subr.mxu0 0.0
  %2091 = vmatpush2.msra.mxu0 0.0
  %2092 = vmatprep.subr.mxu0 0.0
  %2093 = vmatpush2.msra.mxu0 0.0
  %2094 = vmatprep.subr.mxu0 0.0
  %2095 = vmatpush2.msra.mxu0 0.0
  %2096 = vmatprep.subr.mxu0 0.0
  %2097 = vmatpush2.msra.mxu0 0.0
  %2098 = vmatprep.mubr.f32.mxu0 0.0
  %2099 = vmatmul.mubr.f32.gmra.mxu0 %v2032
  %v2100 = vpop.f32.mrf.mxu0
  %v2101 = vadd.f32 0.0, %v2100
  %v2102 = vpop.f32.mrf.mxu0
  %2103 = vdwg.mxu0
  %v2104 = vadd.f32 %v1329, %v2101
  %v2105 = vxor.u32 %v2104, 2147483648
  %v2106 = vmul.f32 %v2105, 1.442695
  %v2107 = vpow.pop %v2106
  %v2108 = vadd.f32 %v2107, 1.0
  %v2109 = vrcp.pop %v2108
  %v2110 = vmul.f32 1.0, %v2109
  %v2111 = vtanh.pop %v2104
  %v2112 = vmul.f32 %v2110, %v2022
  %2114 = vrot.lane.b32.xlu0 %v2111, 64
  %v2115 = vpop.permute.xlu0 %2114
  %v2117 = vmul.f32 %v2110, %v2115
  %2119 = vrot.lane.b32.xlu0 %v2117, 32
  %v2120 = vpop.permute.xlu0 %2119
  %v2122 = vadd.f32 %v2112, %v2120
  %v2123 = vtanh.pop %v2122
  %2125 = vrot.lane.b32.xlu0 %v2123, 64
  %v2126 = vpop.permute.xlu0 %2125
  %v2128 = vmul.f32 %v2110, %v2126
  %2130 = vrot.lane.b32.xlu0 %v2128, 32
  %v2131 = vpop.permute.xlu0 %2130
  %v2133 = vsel %vm1040, %v2131, 0.0
  %2134 = vadd.xlane.f32.xlu0 %v2133
  %v2135 = vpop.xlane.xlu0 %2134
  %v2136 = vrcp.pop 32.0
  %v2137 = vmul.f32 %v2135, %v2136
  %v2138 = vsub.f32 %v2128, %v2137
  %v2139 = vmul.f32 %v2138, %v2138
  %2141 = vrot.lane.b32.xlu0 %v2139, 32
  %v2142 = vpop.permute.xlu0 %2141
  %v2144 = vsel %vm1040, %v2142, 0.0
  %2145 = vadd.xlane.f32.xlu0 %v2144
  %v2146 = vpop.xlane.xlu0 %2145
  %v2147 = vmul.f32 %v2146, %v2136
  %v2148 = vadd.f32 %v2147, 1e-05
  %v2149 = vrsqrt.pop %v2148
  %v2150 = vmul.f32 %v2138, %v2149
  %v2151 = vld [vmem:[%s9] sm:$0x1]
  %v2153 = vlaneseq
  %v2154 = vshrl.u32 %v2153, 7
  %v2155 = vsub.s32 0, %v2154
  %v2156 = vrot.slane %v2151, %v2155
  %2157 = vrot.lane.b32.xlu0 %v2156, 96
  %v2158 = vpop.permute.xlu0 %2157
  %v2160 = vmul.f32 %v2150, %v2158
  %v2161 = vld [vmem:[%s10] sm:$0x1]
  %v2163 = vlaneseq
  %v2164 = vshrl.u32 %v2163, 7
  %v2165 = vsub.s32 0, %v2164
  %v2166 = vrot.slane %v2161, %v2165
  %2167 = vrot.lane.b32.xlu0 %v2166, 96
  %v2168 = vpop.permute.xlu0 %2167
  %v2170 = vadd.f32 %v2160, %v2168
  %v2171 = vld [vmem:[%s11] sm:$0xff]
  %v2172 = vld [vmem:[%s11 + $0x8] sm:$0xff]
  %v2173 = vld [vmem:[%s11 + $0x10] sm:$0xff]
  %v2174 = vld [vmem:[%s11 + $0x18] sm:$0xff]
  %v2175 = vld [vmem:[%s12] sm:$0x1]
  %v2177 = vlaneseq
  %v2178 = vshrl.u32 %v2177, 7
  %v2179 = vsub.s32 0, %v2178
  %v2180 = vrot.slane %v2175, %v2179
  %2183 = vrot.lane.b32.xlu0 %v2170, 32
  %v2184 = vpop.permute.xlu0 %2183
  %v2185 = vsel %vm1040, %v2184, 0
  %2187 = vmatprep.subr.mxu0 0.0
  %2188 = vmatpush1.msra.mxu0 0.0
  %2189 = vmatprep.subr.mxu0 0.0
  %2190 = vmatpush1.msra.mxu0 0.0
  %2191 = vmatprep.subr.mxu0 0.0
  %2192 = vmatpush1.msra.mxu0 0.0
  %2193 = vmatprep.subr.mxu0 0.0
  %2194 = vmatpush1.msra.mxu0 0.0
  %2195 = vmatprep.subr.mxu0 0.0
  %2196 = vmatpush1.msra.mxu0 0.0
  %2197 = vmatprep.subr.mxu0 0.0
  %2198 = vmatpush1.msra.mxu0 0.0
  %2199 = vmatprep.subr.mxu0 0.0
  %2200 = vmatpush1.msra.mxu0 0.0
  %2201 = vmatprep.subr.mxu0 0.0
  %2202 = vmatpush1.msra.mxu0 0.0
  %2203 = vmatprep.subr.mxu0 0.0
  %2204 = vmatpush1.msra.mxu0 0.0
  %2205 = vmatprep.subr.mxu0 0.0
  %2206 = vmatpush1.msra.mxu0 0.0
  %2207 = vmatprep.subr.mxu0 0.0
  %2208 = vmatpush1.msra.mxu0 0.0
  %2209 = vmatprep.subr.mxu0 0.0
  %2210 = vmatpush1.msra.mxu0 0.0
  %2211 = vmatprep.subr.mxu0 0.0
  %2212 = vmatpush1.msra.mxu0 %v2174
  %2213 = vmatprep.subr.mxu0 0.0
  %2214 = vmatpush1.msra.mxu0 %v2173
  %2215 = vmatprep.subr.mxu0 0.0
  %2216 = vmatpush1.msra.mxu0 %v2172
  %2217 = vmatprep.subr.mxu0 0.0
  %2218 = vmatpush1.msra.mxu0 %v2171
  %2219 = vmatprep.subr.mxu0 0.0
  %2220 = vmatpush2.msra.mxu0 0.0
  %2221 = vmatprep.subr.mxu0 0.0
  %2222 = vmatpush2.msra.mxu0 0.0
  %2223 = vmatprep.subr.mxu0 0.0
  %2224 = vmatpush2.msra.mxu0 0.0
  %2225 = vmatprep.subr.mxu0 0.0
  %2226 = vmatpush2.msra.mxu0 0.0
  %2227 = vmatprep.subr.mxu0 0.0
  %2228 = vmatpush2.msra.mxu0 0.0
  %2229 = vmatprep.subr.mxu0 0.0
  %2230 = vmatpush2.msra.mxu0 0.0
  %2231 = vmatprep.subr.mxu0 0.0
  %2232 = vmatpush2.msra.mxu0 0.0
  %2233 = vmatprep.subr.mxu0 0.0
  %2234 = vmatpush2.msra.mxu0 0.0
  %2235 = vmatprep.subr.mxu0 0.0
  %2236 = vmatpush2.msra.mxu0 0.0
  %2237 = vmatprep.subr.mxu0 0.0
  %2238 = vmatpush2.msra.mxu0 0.0
  %2239 = vmatprep.subr.mxu0 0.0
  %2240 = vmatpush2.msra.mxu0 0.0
  %2241 = vmatprep.subr.mxu0 0.0
  %2242 = vmatpush2.msra.mxu0 0.0
  %2243 = vmatprep.subr.mxu0 0.0
  %2244 = vmatpush2.msra.mxu0 0.0
  %2245 = vmatprep.subr.mxu0 0.0
  %2246 = vmatpush2.msra.mxu0 0.0
  %2247 = vmatprep.subr.mxu0 0.0
  %2248 = vmatpush2.msra.mxu0 0.0
  %2249 = vmatprep.subr.mxu0 0.0
  %2250 = vmatpush2.msra.mxu0 0.0
  %2251 = vmatprep.mubr.f32.mxu0 0.0
  %2252 = vmatmul.mubr.f32.gmra.mxu0 %v2185
  %v2253 = vpop.f32.mrf.mxu0
  %v2254 = vadd.f32 %v2180, %v2253
  %v2255 = vpop.f32.mrf.mxu0
  %2256 = vdwg.mxu0
  %v2257 = vmax.f32 %v2254, 0.0
  %v2258 = vld [vmem:[%s13] sm:$0x1]
  %v2260 = vlaneseq
  %v2261 = vshrl.u32 %v2260, 7
  %v2262 = vsub.s32 0, %v2261
  %v2263 = vrot.slane %v2258, %v2262
  %v2265 = vmul.f32 %v2257, %v2263
  %v2266 = vsel %vm1040, %v2265, 0.0
  %2267 = vadd.xlane.f32.xlu0 %v2266
  %v2268 = vpop.xlane.xlu0 %2267
  %v2269 = vld [vmem:[#allocation2] sm:$0x1]
  %v2271 = vlaneseq
  %v2272 = vshrl.u32 %v2271, 7
  %v2273 = vsub.s32 0, %v2272
  %v2274 = vrot.slane %v2269, %v2273
  %v2276 = vadd.f32 %v2268, %v2274
  %vm2277 = vcmask 7168
  %2278 = vst.msk [vmem:[%s15] sm:$0xff] %vm2277, %v2276
  // Predicated region
  $region62: #{lstm_model_forward.1} parent=0 // pred_check
    _
  $region63: #{lstm_model_forward.1} parent=0 // pred_check_branch
    %2280 = sbr.rel (0) target = $region65
  $region64: #{lstm_model_forward.1} parent=0 // pred_region
    _
  $region65: #{lstm_model_forward.1} parent=0 // pred_fallthru
    _
  // Predicated region
  $region66: #{lstm_model_forward.1} parent=0 // pred_check
    _
  $region67: #{lstm_model_forward.1} parent=0 // pred_check_branch
    %2282 = sbr.rel (0) target = $region69
  $region68: #{lstm_model_forward.1} parent=0 // pred_region
    _
  $region69: #{lstm_model_forward.1} parent=0 // pred_fallthru
    _

</llo_original>
